<compile_context>
chip_gen: v5e
topology: v5e:2x2
jax: 0.10.0
libtpu: 0.0.40
codegen_flags: <defaults>
</compile_context>

<pallas_src>
import jax
import jax.numpy as jnp
from jax.experimental import pallas as pl
from jax.experimental.pallas import tpu as pltpu


def _round_up(x, m):
    return ((x + m - 1) // m) * m


# ------------------------------ fused kernel ------------------------------- #

def _fused_forward(xp_flat, w_taps, b_col, whm, bh_row, *, B, H, W, Hp, Wp, chunk):
    """Single-block fused forward: conv (implicit GEMM) + ReLU -> flatten -> linear.

    xp_flat : (Cin, B*Hp*Wp)        zero-padded input; channels on sublanes,
                                    flat padded pixels (b, hp, wp) on lanes
    w_taps  : (Kh*Kw, Cout, Cin)    conv weight, one (Cout, Cin) matrix per tap
    b_col   : (Cout, 1)             conv bias
    whm     : (classes, Cout*chunk) head weight, zero-padded into the
                                    padded-stride pixel layout of feat_flat
    bh_row  : (1, classes)          head bias
    returns (preds (B, classes), feat_flat (B, Cout*chunk))
    """
    cin, m = xp_flat.shape
    n_taps, cout, _ = w_taps.shape
    n_classes = whm.shape[0]
    kdim = whm.shape[1]
    pp = Hp * Wp                     # padded pixels per image (324)
    qv = (H - 1) * Wp + W            # valid conv-output span per image (286)
    kw = 3                           # 3x3 conv

    def kernel(xp_ref, wt_ref, bc_ref, wh_ref, bh_ref, pred_ref, feat_ref):
        # feat_ref is (B, Cout*chunk), lane-dense; chunk is 128-aligned so every
        # per-channel store starts on a lane-group boundary.  Zero-init once so
        # the (zero-weighted) pad columns stay finite for the head GEMM.
        feat_ref[...] = jnp.zeros_like(feat_ref)

        bias_c = bc_ref[...]                                       # (Cout, 1)
        for b in range(B):
            # base_module: implicit-GEMM conv.  Tap (di, dj) is a constant lane
            # shift in the padded flat layout -> 9 shifted ref loads, each fed
            # to a (Cout, Cin) @ (Cin, qv) MXU matmul, accumulated in registers.
            acc = jnp.zeros((cout, qv), jnp.float32)
            for t in range(n_taps):
                di, dj = t // kw, t % kw
                start = b * pp + di * Wp + dj
                acc = acc + jnp.dot(wt_ref[t],
                                    xp_ref[:, start:start + qv],
                                    preferred_element_type=jnp.float32)
            acc = jnp.maximum(acc + bias_c, 0.0)                   # bias + ReLU, f32

            # Lay channels side by side on lanes so the head "flatten" becomes a
            # plain single-axis contraction (no in-kernel transpose/reshape).
            for c in range(cout):
                feat_ref[b:b + 1, c * chunk:c * chunk + qv] = acc[c:c + 1, :]

        # head_module: Flatten + Linear as ONE MXU matmul, contracting the shared
        # last dim of (B, Cout*chunk) and (classes, Cout*chunk).  Invalid /
        # padded feature columns meet zero weight columns, so they contribute 0.
        preds = jax.lax.dot_general(
            feat_ref[...], wh_ref[...],
            dimension_numbers=(((1,), (1,)), ((), ())),
            preferred_element_type=jnp.float32)                    # (B, classes)
        pred_ref[...] = preds + bh_ref[...]                        # single 2-D store

    conv_flops = 2 * B * n_taps * cout * cin * qv
    head_flops = 2 * B * n_classes * kdim
    bytes_accessed = 4 * (cin * m + n_taps * cout * cin + cout
                          + n_classes * kdim + n_classes
                          + B * n_classes + B * kdim)

    return pl.pallas_call(
        kernel,
        out_shape=(
            jax.ShapeDtypeStruct((B, n_classes), jnp.float32),
            jax.ShapeDtypeStruct((B, kdim), jnp.float32),
        ),
        grid=(1,),
        in_specs=[
            pl.BlockSpec((cin, m), lambda i: (0, 0)),
            pl.BlockSpec((n_taps, cout, cin), lambda i: (0, 0, 0)),
            pl.BlockSpec((cout, 1), lambda i: (0, 0)),
            pl.BlockSpec((n_classes, kdim), lambda i: (0, 0)),
            pl.BlockSpec((1, n_classes), lambda i: (0, 0)),
        ],
        out_specs=(
            pl.BlockSpec((B, n_classes), lambda i: (0, 0)),
            pl.BlockSpec((B, kdim), lambda i: (0, 0)),
        ),
        compiler_params=pltpu.CompilerParams(
            dimension_semantics=("arbitrary",)),
        cost_estimate=pl.CostEstimate(flops=conv_flops + head_flops,
                                      transcendentals=0,
                                      bytes_accessed=bytes_accessed),
    )(xp_flat, w_taps, b_col, whm, bh_row)


# ------------------------- wrapper-side data plumbing ----------------------- #

@jax.jit
def _sequential_forward_impl(x, w_taps, b_col, whm, bh_row):
    B, cin, H, W = x.shape
    cout = b_col.shape[0]
    Hp, Wp = H + 2, W + 2
    chunk = whm.shape[1] // cout

    # Only wrapper-side prep: zero-pad (~10 KiB) and flatten to the
    # channel-major / padded-pixel-minor layout the implicit GEMM consumes.
    # (Replaces the old 73 KiB im2col HBM round trip; review item 4.)
    xpad = jnp.pad(x, ((0, 0), (0, 0), (1, 1), (1, 1)))
    xp_flat = xpad.transpose(1, 0, 2, 3).reshape(cin, B * Hp * Wp)

    preds, feat_flat = _fused_forward(xp_flat, w_taps, b_col, whm, bh_row,
                                      B=B, H=H, W=W, Hp=Hp, Wp=Wp, chunk=chunk)

    # Tiny (~16 KiB) XLA-side extraction of NCHW features from the kernel's
    # padded-stride layout (review item 3).
    feats = feat_flat.reshape(B, cout, chunk)[:, :, :H * Wp]
    feats = feats.reshape(B, cout, H, Wp)[:, :, :, :W]            # (B, Cout, H, W)
    return preds, feats


# ----------------------- SequentiallySplitModel glue ------------------------ #

class SequentiallySplitModelPallas:
    """JAX/Pallas version of fl4health SequentiallySplitModel (conv base + linear head)."""

    def __init__(self, key, in_c=4, out_c=8, hw=16, num_classes=10,
                 flatten_features=True):
        self.in_c, self.out_c, self.hw = in_c, out_c, hw
        self.num_classes = num_classes
        self.flatten_features = flatten_features

        k1, k2, k3, k4 = jax.random.split(key, 4)
        fan_conv = in_c * 3 * 3
        bnd_c = 1.0 / jnp.sqrt(fan_conv)
        # torch-layout parameters (kept for the reference check)
        self.w_conv = jax.random.uniform(
            k1, (out_c, in_c, 3, 3), jnp.float32, -bnd_c, bnd_c)
        self.b_conv = jax.random.uniform(
            k2, (out_c,), jnp.float32, -bnd_c, bnd_c)
        fan_lin = out_c * hw * hw
        bnd_l = 1.0 / jnp.sqrt(fan_lin)
        self.w_head = jax.random.uniform(
            k3, (num_classes, fan_lin), jnp.float32, -bnd_l, bnd_l)
        self.b_head = jax.random.uniform(
            k4, (num_classes,), jnp.float32, -bnd_l, bnd_l)

        # --- cached kernel-friendly layouts (derived once, not per forward) ---
        Hp = Wp = hw + 2
        chunk = _round_up(hw * Wp, 128)                   # 288 -> 384 (lane aligned)
        self.chunk = chunk
        # one (Cout, Cin) matrix per 3x3 tap, tap index t = di*3 + dj
        self.w_taps = self.w_conv.transpose(2, 3, 0, 1).reshape(9, out_c, in_c)
        self.b_col = self.b_conv.reshape(out_c, 1)
        # head weight re-laid into the padded-stride pixel layout, zero elsewhere
        whm = self.w_head.reshape(num_classes, out_c, hw, hw)
        whm = jnp.pad(whm, ((0, 0), (0, 0), (0, 0), (0, Wp - hw)))     # w -> Wp
        whm = whm.reshape(num_classes, out_c, hw * Wp)
        whm = jnp.pad(whm, ((0, 0), (0, 0), (0, chunk - hw * Wp)))     # -> chunk
        self.whm = whm.reshape(num_classes, out_c * chunk)             # (10, 3072)
        self.bh_row = self.b_head.reshape(1, num_classes)

    def _flatten_features(self, features):
        return features.reshape(features.shape[0], -1)

    def sequential_forward(self, x):
        preds, features = _sequential_forward_impl(
            x, self.w_taps, self.b_col, self.whm, self.bh_row)
        return preds, features

    def features_forward(self, x):
        _, features = self.sequential_forward(x)
        return self._flatten_features(features) if self.flatten_features else features

    def forward(self, x):
        predictions, features = self.sequential_forward(x)
        predictions_dict = {"prediction": predictions}
        if self.flatten_features:
            features_dict = {"features": self._flatten_features(features)}
        else:
            features_dict = {"features": features}
        return predictions_dict, features_dict


# --------------------------------- main ------------------------------------- #

if __name__ == "__main__":
    key = jax.random.PRNGKey(0)
    k_param, k_input = jax.random.split(key)

    model = SequentiallySplitModelPallas(k_param, in_c=4, out_c=8, hw=16,
                                         num_classes=10, flatten_features=True)

    # input is NCHW, matching the PyTorch conv convention.
    x = jax.random.normal(k_input, (2, 4, 16, 16), dtype=jnp.float32)

    preds_dict, feats_dict = model.forward(x)
    jax.block_until_ready(preds_dict["prediction"])
    jax.block_until_ready(feats_dict["features"])

    # shapes match the torch module semantics
    assert preds_dict["prediction"].shape == (2, 10)
    assert feats_dict["features"].shape == (2, 8 * 16 * 16)

    # numerical cross-check against a pure-JAX reference (all f32)
    ref_feat = jax.nn.relu(
        jax.lax.conv_general_dilated(
            x, model.w_conv, window_strides=(1, 1), padding="SAME",
            dimension_numbers=("NCHW", "OIHW", "NCHW"))
        + model.b_conv.reshape(1, -1, 1, 1))
    ref_pred = ref_feat.reshape(2, -1) @ model.w_head.T + model.b_head
    assert jnp.allclose(feats_dict["features"], ref_feat.reshape(2, -1),
                        atol=1e-3, rtol=1e-3)
    assert jnp.allclose(preds_dict["prediction"], ref_pred, atol=1e-3, rtol=1e-3)

    print("KERNEL_OK")
</pallas_src>

<mosaic_0001>
module attributes {stable_mosaic.version = 11 : i64} {
  func.func @kernel(%arg0: i32, %arg1: memref<4x648xf32, #tpu.memory_space<vmem>>, %arg2: memref<9x8x4xf32, #tpu.memory_space<vmem>>, %arg3: memref<8x1xf32, #tpu.memory_space<vmem>>, %arg4: memref<10x3072xf32, #tpu.memory_space<vmem>>, %arg5: memref<1x10xf32, #tpu.memory_space<vmem>>, %arg6: memref<2x10xf32, #tpu.memory_space<vmem>>, %arg7: memref<2x3072xf32, #tpu.memory_space<vmem>>) attributes {dimension_semantics = [#tpu.dimension_semantics<arbitrary>], iteration_bounds = array<i64: 1>, scalar_prefetch = 0 : i64, scratch_operands = 0 : i64, tpu.core_type = #tpu.core_type<tc>, window_params = [{pipeline_mode = #tpu.pipeline_mode<synchronous>, transform_indices = @transform_0, window_bounds = array<i64: 4, 648>}, {pipeline_mode = #tpu.pipeline_mode<synchronous>, transform_indices = @transform_1, window_bounds = array<i64: 9, 8, 4>}, {pipeline_mode = #tpu.pipeline_mode<synchronous>, transform_indices = @transform_2, window_bounds = array<i64: 8, 1>}, {pipeline_mode = #tpu.pipeline_mode<synchronous>, transform_indices = @transform_3, window_bounds = array<i64: 10, 3072>}, {pipeline_mode = #tpu.pipeline_mode<synchronous>, transform_indices = @transform_4, window_bounds = array<i64: 1, 10>}, {pipeline_mode = #tpu.pipeline_mode<synchronous>, transform_indices = @transform_5, window_bounds = array<i64: 2, 10>}, {pipeline_mode = #tpu.pipeline_mode<synchronous>, transform_indices = @transform_6, window_bounds = array<i64: 2, 3072>}]} {
    %cst = arith.constant 0.000000e+00 : f32
    %0 = vector.broadcast %cst : f32 to vector<2x3072xf32>
    %c0 = arith.constant 0 : index
    %c0_0 = arith.constant 0 : index
    %1 = vector.load %arg7[%c0, %c0_0] : memref<2x3072xf32, #tpu.memory_space<vmem>>, vector<2x3072xf32>
    tpu.vector_store %arg7[%c0, %c0_0], %0 {strides = array<i32>} : memref<2x3072xf32, #tpu.memory_space<vmem>>, vector<2x3072xf32>,
    %c0_1 = arith.constant 0 : index
    %c0_2 = arith.constant 0 : index
    %2 = vector.load %arg3[%c0_1, %c0_2] : memref<8x1xf32, #tpu.memory_space<vmem>>, vector<8x1xf32>
    %cst_3 = arith.constant 0.000000e+00 : f32
    %3 = vector.broadcast %cst_3 : f32 to vector<8x286xf32>
    %c0_4 = arith.constant 0 : index
    %c0_5 = arith.constant 0 : index
    %c0_6 = arith.constant 0 : index
    %4 = vector.load %arg2[%c0_4, %c0_5, %c0_6] : memref<9x8x4xf32, #tpu.memory_space<vmem>>, vector<1x8x4xf32>
    %5 = vector.shape_cast %4 : vector<1x8x4xf32> to vector<8x4xf32>
    %c0_7 = arith.constant 0 : index
    %c0_8 = arith.constant 0 : index
    %6 = vector.load %arg1[%c0_7, %c0_8] : memref<4x648xf32, #tpu.memory_space<vmem>>, vector<4x286xf32>
    %cst_9 = arith.constant dense<0.000000e+00> : vector<8x286xf32>
    %7 = tpu.matmul %5, %6, %cst_9 {dimension_numbers = #tpu.dot_dimension_numbers<[1], [0], [0], [1], [0, 0, 1, 1], [], []>} : vector<8x4xf32>, vector<4x286xf32>, vector<8x286xf32> -> vector<8x286xf32>
    %8 = arith.addf %3, %7 : vector<8x286xf32>
    %c1 = arith.constant 1 : index
    %c0_10 = arith.constant 0 : index
    %c0_11 = arith.constant 0 : index
    %9 = vector.load %arg2[%c1, %c0_10, %c0_11] : memref<9x8x4xf32, #tpu.memory_space<vmem>>, vector<1x8x4xf32>
    %10 = vector.shape_cast %9 : vector<1x8x4xf32> to vector<8x4xf32>
    %c0_12 = arith.constant 0 : index
    %c1_13 = arith.constant 1 : index
    %11 = vector.load %arg1[%c0_12, %c1_13] : memref<4x648xf32, #tpu.memory_space<vmem>>, vector<4x286xf32>
    %cst_14 = arith.constant dense<0.000000e+00> : vector<8x286xf32>
    %12 = tpu.matmul %10, %11, %cst_14 {dimension_numbers = #tpu.dot_dimension_numbers<[1], [0], [0], [1], [0, 0, 1, 1], [], []>} : vector<8x4xf32>, vector<4x286xf32>, vector<8x286xf32> -> vector<8x286xf32>
    %13 = arith.addf %8, %12 : vector<8x286xf32>
    %c2 = arith.constant 2 : index
    %c0_15 = arith.constant 0 : index
    %c0_16 = arith.constant 0 : index
    %14 = vector.load %arg2[%c2, %c0_15, %c0_16] : memref<9x8x4xf32, #tpu.memory_space<vmem>>, vector<1x8x4xf32>
    %15 = vector.shape_cast %14 : vector<1x8x4xf32> to vector<8x4xf32>
    %c0_17 = arith.constant 0 : index
    %c2_18 = arith.constant 2 : index
    %16 = vector.load %arg1[%c0_17, %c2_18] : memref<4x648xf32, #tpu.memory_space<vmem>>, vector<4x286xf32>
    %cst_19 = arith.constant dense<0.000000e+00> : vector<8x286xf32>
    %17 = tpu.matmul %15, %16, %cst_19 {dimension_numbers = #tpu.dot_dimension_numbers<[1], [0], [0], [1], [0, 0, 1, 1], [], []>} : vector<8x4xf32>, vector<4x286xf32>, vector<8x286xf32> -> vector<8x286xf32>
    %18 = arith.addf %13, %17 : vector<8x286xf32>
    %c3 = arith.constant 3 : index
    %c0_20 = arith.constant 0 : index
    %c0_21 = arith.constant 0 : index
    %19 = vector.load %arg2[%c3, %c0_20, %c0_21] : memref<9x8x4xf32, #tpu.memory_space<vmem>>, vector<1x8x4xf32>
    %20 = vector.shape_cast %19 : vector<1x8x4xf32> to vector<8x4xf32>
    %c0_22 = arith.constant 0 : index
    %c18 = arith.constant 18 : index
    %21 = vector.load %arg1[%c0_22, %c18] : memref<4x648xf32, #tpu.memory_space<vmem>>, vector<4x286xf32>
    %cst_23 = arith.constant dense<0.000000e+00> : vector<8x286xf32>
    %22 = tpu.matmul %20, %21, %cst_23 {dimension_numbers = #tpu.dot_dimension_numbers<[1], [0], [0], [1], [0, 0, 1, 1], [], []>} : vector<8x4xf32>, vector<4x286xf32>, vector<8x286xf32> -> vector<8x286xf32>
    %23 = arith.addf %18, %22 : vector<8x286xf32>
    %c4 = arith.constant 4 : index
    %c0_24 = arith.constant 0 : index
    %c0_25 = arith.constant 0 : index
    %24 = vector.load %arg2[%c4, %c0_24, %c0_25] : memref<9x8x4xf32, #tpu.memory_space<vmem>>, vector<1x8x4xf32>
    %25 = vector.shape_cast %24 : vector<1x8x4xf32> to vector<8x4xf32>
    %c0_26 = arith.constant 0 : index
    %c19 = arith.constant 19 : index
    %26 = vector.load %arg1[%c0_26, %c19] : memref<4x648xf32, #tpu.memory_space<vmem>>, vector<4x286xf32>
    %cst_27 = arith.constant dense<0.000000e+00> : vector<8x286xf32>
    %27 = tpu.matmul %25, %26, %cst_27 {dimension_numbers = #tpu.dot_dimension_numbers<[1], [0], [0], [1], [0, 0, 1, 1], [], []>} : vector<8x4xf32>, vector<4x286xf32>, vector<8x286xf32> -> vector<8x286xf32>
    %28 = arith.addf %23, %27 : vector<8x286xf32>
    %c5 = arith.constant 5 : index
    %c0_28 = arith.constant 0 : index
    %c0_29 = arith.constant 0 : index
    %29 = vector.load %arg2[%c5, %c0_28, %c0_29] : memref<9x8x4xf32, #tpu.memory_space<vmem>>, vector<1x8x4xf32>
    %30 = vector.shape_cast %29 : vector<1x8x4xf32> to vector<8x4xf32>
    %c0_30 = arith.constant 0 : index
    %c20 = arith.constant 20 : index
    %31 = vector.load %arg1[%c0_30, %c20] : memref<4x648xf32, #tpu.memory_space<vmem>>, vector<4x286xf32>
    %cst_31 = arith.constant dense<0.000000e+00> : vector<8x286xf32>
    %32 = tpu.matmul %30, %31, %cst_31 {dimension_numbers = #tpu.dot_dimension_numbers<[1], [0], [0], [1], [0, 0, 1, 1], [], []>} : vector<8x4xf32>, vector<4x286xf32>, vector<8x286xf32> -> vector<8x286xf32>
    %33 = arith.addf %28, %32 : vector<8x286xf32>
    %c6 = arith.constant 6 : index
    %c0_32 = arith.constant 0 : index
    %c0_33 = arith.constant 0 : index
    %34 = vector.load %arg2[%c6, %c0_32, %c0_33] : memref<9x8x4xf32, #tpu.memory_space<vmem>>, vector<1x8x4xf32>
    %35 = vector.shape_cast %34 : vector<1x8x4xf32> to vector<8x4xf32>
    %c0_34 = arith.constant 0 : index
    %c36 = arith.constant 36 : index
    %36 = vector.load %arg1[%c0_34, %c36] : memref<4x648xf32, #tpu.memory_space<vmem>>, vector<4x286xf32>
    %cst_35 = arith.constant dense<0.000000e+00> : vector<8x286xf32>
    %37 = tpu.matmul %35, %36, %cst_35 {dimension_numbers = #tpu.dot_dimension_numbers<[1], [0], [0], [1], [0, 0, 1, 1], [], []>} : vector<8x4xf32>, vector<4x286xf32>, vector<8x286xf32> -> vector<8x286xf32>
    %38 = arith.addf %33, %37 : vector<8x286xf32>
    %c7 = arith.constant 7 : index
    %c0_36 = arith.constant 0 : index
    %c0_37 = arith.constant 0 : index
    %39 = vector.load %arg2[%c7, %c0_36, %c0_37] : memref<9x8x4xf32, #tpu.memory_space<vmem>>, vector<1x8x4xf32>
    %40 = vector.shape_cast %39 : vector<1x8x4xf32> to vector<8x4xf32>
    %c0_38 = arith.constant 0 : index
    %c37 = arith.constant 37 : index
    %41 = vector.load %arg1[%c0_38, %c37] : memref<4x648xf32, #tpu.memory_space<vmem>>, vector<4x286xf32>
    %cst_39 = arith.constant dense<0.000000e+00> : vector<8x286xf32>
    %42 = tpu.matmul %40, %41, %cst_39 {dimension_numbers = #tpu.dot_dimension_numbers<[1], [0], [0], [1], [0, 0, 1, 1], [], []>} : vector<8x4xf32>, vector<4x286xf32>, vector<8x286xf32> -> vector<8x286xf32>
    %43 = arith.addf %38, %42 : vector<8x286xf32>
    %c8 = arith.constant 8 : index
    %c0_40 = arith.constant 0 : index
    %c0_41 = arith.constant 0 : index
    %44 = vector.load %arg2[%c8, %c0_40, %c0_41] : memref<9x8x4xf32, #tpu.memory_space<vmem>>, vector<1x8x4xf32>
    %45 = vector.shape_cast %44 : vector<1x8x4xf32> to vector<8x4xf32>
    %c0_42 = arith.constant 0 : index
    %c38 = arith.constant 38 : index
    %46 = vector.load %arg1[%c0_42, %c38] : memref<4x648xf32, #tpu.memory_space<vmem>>, vector<4x286xf32>
    %cst_43 = arith.constant dense<0.000000e+00> : vector<8x286xf32>
    %47 = tpu.matmul %45, %46, %cst_43 {dimension_numbers = #tpu.dot_dimension_numbers<[1], [0], [0], [1], [0, 0, 1, 1], [], []>} : vector<8x4xf32>, vector<4x286xf32>, vector<8x286xf32> -> vector<8x286xf32>
    %48 = arith.addf %43, %47 : vector<8x286xf32>
    %49 = vector.broadcast %2 : vector<8x1xf32> to vector<8x286xf32>
    %50 = arith.addf %48, %49 : vector<8x286xf32>
    %cst_44 = arith.constant 0.000000e+00 : f32
    %51 = vector.broadcast %cst_44 : f32 to vector<8x286xf32>
    %52 = arith.maximumf %50, %51 : vector<8x286xf32>
    %53 = vector.extract_strided_slice %52 {offsets = [0, 0], sizes = [1, 286], strides = [1, 1]} : vector<8x286xf32> to vector<1x286xf32>
    %c0_45 = arith.constant 0 : index
    %c0_46 = arith.constant 0 : index
    %54 = vector.load %arg7[%c0_45, %c0_46] : memref<2x3072xf32, #tpu.memory_space<vmem>>, vector<1x286xf32>
    tpu.vector_store %arg7[%c0_45, %c0_46], %53 {strides = array<i32>} : memref<2x3072xf32, #tpu.memory_space<vmem>>, vector<1x286xf32>,
    %55 = vector.extract_strided_slice %52 {offsets = [1, 0], sizes = [1, 286], strides = [1, 1]} : vector<8x286xf32> to vector<1x286xf32>
    %c0_47 = arith.constant 0 : index
    %c384 = arith.constant 384 : index
    %56 = vector.load %arg7[%c0_47, %c384] : memref<2x3072xf32, #tpu.memory_space<vmem>>, vector<1x286xf32>
    tpu.vector_store %arg7[%c0_47, %c384], %55 {strides = array<i32>} : memref<2x3072xf32, #tpu.memory_space<vmem>>, vector<1x286xf32>,
    %57 = vector.extract_strided_slice %52 {offsets = [2, 0], sizes = [1, 286], strides = [1, 1]} : vector<8x286xf32> to vector<1x286xf32>
    %c0_48 = arith.constant 0 : index
    %c768 = arith.constant 768 : index
    %58 = vector.load %arg7[%c0_48, %c768] : memref<2x3072xf32, #tpu.memory_space<vmem>>, vector<1x286xf32>
    tpu.vector_store %arg7[%c0_48, %c768], %57 {strides = array<i32>} : memref<2x3072xf32, #tpu.memory_space<vmem>>, vector<1x286xf32>,
    %59 = vector.extract_strided_slice %52 {offsets = [3, 0], sizes = [1, 286], strides = [1, 1]} : vector<8x286xf32> to vector<1x286xf32>
    %c0_49 = arith.constant 0 : index
    %c1152 = arith.constant 1152 : index
    %60 = vector.load %arg7[%c0_49, %c1152] : memref<2x3072xf32, #tpu.memory_space<vmem>>, vector<1x286xf32>
    tpu.vector_store %arg7[%c0_49, %c1152], %59 {strides = array<i32>} : memref<2x3072xf32, #tpu.memory_space<vmem>>, vector<1x286xf32>,
    %61 = vector.extract_strided_slice %52 {offsets = [4, 0], sizes = [1, 286], strides = [1, 1]} : vector<8x286xf32> to vector<1x286xf32>
    %c0_50 = arith.constant 0 : index
    %c1536 = arith.constant 1536 : index
    %62 = vector.load %arg7[%c0_50, %c1536] : memref<2x3072xf32, #tpu.memory_space<vmem>>, vector<1x286xf32>
    tpu.vector_store %arg7[%c0_50, %c1536], %61 {strides = array<i32>} : memref<2x3072xf32, #tpu.memory_space<vmem>>, vector<1x286xf32>,
    %63 = vector.extract_strided_slice %52 {offsets = [5, 0], sizes = [1, 286], strides = [1, 1]} : vector<8x286xf32> to vector<1x286xf32>
    %c0_51 = arith.constant 0 : index
    %c1920 = arith.constant 1920 : index
    %64 = vector.load %arg7[%c0_51, %c1920] : memref<2x3072xf32, #tpu.memory_space<vmem>>, vector<1x286xf32>
    tpu.vector_store %arg7[%c0_51, %c1920], %63 {strides = array<i32>} : memref<2x3072xf32, #tpu.memory_space<vmem>>, vector<1x286xf32>,
    %65 = vector.extract_strided_slice %52 {offsets = [6, 0], sizes = [1, 286], strides = [1, 1]} : vector<8x286xf32> to vector<1x286xf32>
    %c0_52 = arith.constant 0 : index
    %c2304 = arith.constant 2304 : index
    %66 = vector.load %arg7[%c0_52, %c2304] : memref<2x3072xf32, #tpu.memory_space<vmem>>, vector<1x286xf32>
    tpu.vector_store %arg7[%c0_52, %c2304], %65 {strides = array<i32>} : memref<2x3072xf32, #tpu.memory_space<vmem>>, vector<1x286xf32>,
    %67 = vector.extract_strided_slice %52 {offsets = [7, 0], sizes = [1, 286], strides = [1, 1]} : vector<8x286xf32> to vector<1x286xf32>
    %c0_53 = arith.constant 0 : index
    %c2688 = arith.constant 2688 : index
    %68 = vector.load %arg7[%c0_53, %c2688] : memref<2x3072xf32, #tpu.memory_space<vmem>>, vector<1x286xf32>
    tpu.vector_store %arg7[%c0_53, %c2688], %67 {strides = array<i32>} : memref<2x3072xf32, #tpu.memory_space<vmem>>, vector<1x286xf32>,
    %cst_54 = arith.constant 0.000000e+00 : f32
    %69 = vector.broadcast %cst_54 : f32 to vector<8x286xf32>
    %c0_55 = arith.constant 0 : index
    %c0_56 = arith.constant 0 : index
    %c0_57 = arith.constant 0 : index
    %70 = vector.load %arg2[%c0_55, %c0_56, %c0_57] : memref<9x8x4xf32, #tpu.memory_space<vmem>>, vector<1x8x4xf32>
    %71 = vector.shape_cast %70 : vector<1x8x4xf32> to vector<8x4xf32>
    %c0_58 = arith.constant 0 : index
    %c324 = arith.constant 324 : index
    %72 = vector.load %arg1[%c0_58, %c324] : memref<4x648xf32, #tpu.memory_space<vmem>>, vector<4x286xf32>
    %cst_59 = arith.constant dense<0.000000e+00> : vector<8x286xf32>
    %73 = tpu.matmul %71, %72, %cst_59 {dimension_numbers = #tpu.dot_dimension_numbers<[1], [0], [0], [1], [0, 0, 1, 1], [], []>} : vector<8x4xf32>, vector<4x286xf32>, vector<8x286xf32> -> vector<8x286xf32>
    %74 = arith.addf %69, %73 : vector<8x286xf32>
    %c1_60 = arith.constant 1 : index
    %c0_61 = arith.constant 0 : index
    %c0_62 = arith.constant 0 : index
    %75 = vector.load %arg2[%c1_60, %c0_61, %c0_62] : memref<9x8x4xf32, #tpu.memory_space<vmem>>, vector<1x8x4xf32>
    %76 = vector.shape_cast %75 : vector<1x8x4xf32> to vector<8x4xf32>
    %c0_63 = arith.constant 0 : index
    %c325 = arith.constant 325 : index
    %77 = vector.load %arg1[%c0_63, %c325] : memref<4x648xf32, #tpu.memory_space<vmem>>, vector<4x286xf32>
    %cst_64 = arith.constant dense<0.000000e+00> : vector<8x286xf32>
    %78 = tpu.matmul %76, %77, %cst_64 {dimension_numbers = #tpu.dot_dimension_numbers<[1], [0], [0], [1], [0, 0, 1, 1], [], []>} : vector<8x4xf32>, vector<4x286xf32>, vector<8x286xf32> -> vector<8x286xf32>
    %79 = arith.addf %74, %78 : vector<8x286xf32>
    %c2_65 = arith.constant 2 : index
    %c0_66 = arith.constant 0 : index
    %c0_67 = arith.constant 0 : index
    %80 = vector.load %arg2[%c2_65, %c0_66, %c0_67] : memref<9x8x4xf32, #tpu.memory_space<vmem>>, vector<1x8x4xf32>
    %81 = vector.shape_cast %80 : vector<1x8x4xf32> to vector<8x4xf32>
    %c0_68 = arith.constant 0 : index
    %c326 = arith.constant 326 : index
    %82 = vector.load %arg1[%c0_68, %c326] : memref<4x648xf32, #tpu.memory_space<vmem>>, vector<4x286xf32>
    %cst_69 = arith.constant dense<0.000000e+00> : vector<8x286xf32>
    %83 = tpu.matmul %81, %82, %cst_69 {dimension_numbers = #tpu.dot_dimension_numbers<[1], [0], [0], [1], [0, 0, 1, 1], [], []>} : vector<8x4xf32>, vector<4x286xf32>, vector<8x286xf32> -> vector<8x286xf32>
    %84 = arith.addf %79, %83 : vector<8x286xf32>
    %c3_70 = arith.constant 3 : index
    %c0_71 = arith.constant 0 : index
    %c0_72 = arith.constant 0 : index
    %85 = vector.load %arg2[%c3_70, %c0_71, %c0_72] : memref<9x8x4xf32, #tpu.memory_space<vmem>>, vector<1x8x4xf32>
    %86 = vector.shape_cast %85 : vector<1x8x4xf32> to vector<8x4xf32>
    %c0_73 = arith.constant 0 : index
    %c342 = arith.constant 342 : index
    %87 = vector.load %arg1[%c0_73, %c342] : memref<4x648xf32, #tpu.memory_space<vmem>>, vector<4x286xf32>
    %cst_74 = arith.constant dense<0.000000e+00> : vector<8x286xf32>
    %88 = tpu.matmul %86, %87, %cst_74 {dimension_numbers = #tpu.dot_dimension_numbers<[1], [0], [0], [1], [0, 0, 1, 1], [], []>} : vector<8x4xf32>, vector<4x286xf32>, vector<8x286xf32> -> vector<8x286xf32>
    %89 = arith.addf %84, %88 : vector<8x286xf32>
    %c4_75 = arith.constant 4 : index
    %c0_76 = arith.constant 0 : index
    %c0_77 = arith.constant 0 : index
    %90 = vector.load %arg2[%c4_75, %c0_76, %c0_77] : memref<9x8x4xf32, #tpu.memory_space<vmem>>, vector<1x8x4xf32>
    %91 = vector.shape_cast %90 : vector<1x8x4xf32> to vector<8x4xf32>
    %c0_78 = arith.constant 0 : index
    %c343 = arith.constant 343 : index
    %92 = vector.load %arg1[%c0_78, %c343] : memref<4x648xf32, #tpu.memory_space<vmem>>, vector<4x286xf32>
    %cst_79 = arith.constant dense<0.000000e+00> : vector<8x286xf32>
    %93 = tpu.matmul %91, %92, %cst_79 {dimension_numbers = #tpu.dot_dimension_numbers<[1], [0], [0], [1], [0, 0, 1, 1], [], []>} : vector<8x4xf32>, vector<4x286xf32>, vector<8x286xf32> -> vector<8x286xf32>
    %94 = arith.addf %89, %93 : vector<8x286xf32>
    %c5_80 = arith.constant 5 : index
    %c0_81 = arith.constant 0 : index
    %c0_82 = arith.constant 0 : index
    %95 = vector.load %arg2[%c5_80, %c0_81, %c0_82] : memref<9x8x4xf32, #tpu.memory_space<vmem>>, vector<1x8x4xf32>
    %96 = vector.shape_cast %95 : vector<1x8x4xf32> to vector<8x4xf32>
    %c0_83 = arith.constant 0 : index
    %c344 = arith.constant 344 : index
    %97 = vector.load %arg1[%c0_83, %c344] : memref<4x648xf32, #tpu.memory_space<vmem>>, vector<4x286xf32>
    %cst_84 = arith.constant dense<0.000000e+00> : vector<8x286xf32>
    %98 = tpu.matmul %96, %97, %cst_84 {dimension_numbers = #tpu.dot_dimension_numbers<[1], [0], [0], [1], [0, 0, 1, 1], [], []>} : vector<8x4xf32>, vector<4x286xf32>, vector<8x286xf32> -> vector<8x286xf32>
    %99 = arith.addf %94, %98 : vector<8x286xf32>
    %c6_85 = arith.constant 6 : index
    %c0_86 = arith.constant 0 : index
    %c0_87 = arith.constant 0 : index
    %100 = vector.load %arg2[%c6_85, %c0_86, %c0_87] : memref<9x8x4xf32, #tpu.memory_space<vmem>>, vector<1x8x4xf32>
    %101 = vector.shape_cast %100 : vector<1x8x4xf32> to vector<8x4xf32>
    %c0_88 = arith.constant 0 : index
    %c360 = arith.constant 360 : index
    %102 = vector.load %arg1[%c0_88, %c360] : memref<4x648xf32, #tpu.memory_space<vmem>>, vector<4x286xf32>
    %cst_89 = arith.constant dense<0.000000e+00> : vector<8x286xf32>
    %103 = tpu.matmul %101, %102, %cst_89 {dimension_numbers = #tpu.dot_dimension_numbers<[1], [0], [0], [1], [0, 0, 1, 1], [], []>} : vector<8x4xf32>, vector<4x286xf32>, vector<8x286xf32> -> vector<8x286xf32>
    %104 = arith.addf %99, %103 : vector<8x286xf32>
    %c7_90 = arith.constant 7 : index
    %c0_91 = arith.constant 0 : index
    %c0_92 = arith.constant 0 : index
    %105 = vector.load %arg2[%c7_90, %c0_91, %c0_92] : memref<9x8x4xf32, #tpu.memory_space<vmem>>, vector<1x8x4xf32>
    %106 = vector.shape_cast %105 : vector<1x8x4xf32> to vector<8x4xf32>
    %c0_93 = arith.constant 0 : index
    %c361 = arith.constant 361 : index
    %107 = vector.load %arg1[%c0_93, %c361] : memref<4x648xf32, #tpu.memory_space<vmem>>, vector<4x286xf32>
    %cst_94 = arith.constant dense<0.000000e+00> : vector<8x286xf32>
    %108 = tpu.matmul %106, %107, %cst_94 {dimension_numbers = #tpu.dot_dimension_numbers<[1], [0], [0], [1], [0, 0, 1, 1], [], []>} : vector<8x4xf32>, vector<4x286xf32>, vector<8x286xf32> -> vector<8x286xf32>
    %109 = arith.addf %104, %108 : vector<8x286xf32>
    %c8_95 = arith.constant 8 : index
    %c0_96 = arith.constant 0 : index
    %c0_97 = arith.constant 0 : index
    %110 = vector.load %arg2[%c8_95, %c0_96, %c0_97] : memref<9x8x4xf32, #tpu.memory_space<vmem>>, vector<1x8x4xf32>
    %111 = vector.shape_cast %110 : vector<1x8x4xf32> to vector<8x4xf32>
    %c0_98 = arith.constant 0 : index
    %c362 = arith.constant 362 : index
    %112 = vector.load %arg1[%c0_98, %c362] : memref<4x648xf32, #tpu.memory_space<vmem>>, vector<4x286xf32>
    %cst_99 = arith.constant dense<0.000000e+00> : vector<8x286xf32>
    %113 = tpu.matmul %111, %112, %cst_99 {dimension_numbers = #tpu.dot_dimension_numbers<[1], [0], [0], [1], [0, 0, 1, 1], [], []>} : vector<8x4xf32>, vector<4x286xf32>, vector<8x286xf32> -> vector<8x286xf32>
    %114 = arith.addf %109, %113 : vector<8x286xf32>
    %115 = vector.broadcast %2 : vector<8x1xf32> to vector<8x286xf32>
    %116 = arith.addf %114, %115 : vector<8x286xf32>
    %cst_100 = arith.constant 0.000000e+00 : f32
    %117 = vector.broadcast %cst_100 : f32 to vector<8x286xf32>
    %118 = arith.maximumf %116, %117 : vector<8x286xf32>
    %119 = vector.extract_strided_slice %118 {offsets = [0, 0], sizes = [1, 286], strides = [1, 1]} : vector<8x286xf32> to vector<1x286xf32>
    %c1_101 = arith.constant 1 : index
    %c0_102 = arith.constant 0 : index
    %120 = vector.load %arg7[%c1_101, %c0_102] : memref<2x3072xf32, #tpu.memory_space<vmem>>, vector<1x286xf32>
    tpu.vector_store %arg7[%c1_101, %c0_102], %119 {strides = array<i32>} : memref<2x3072xf32, #tpu.memory_space<vmem>>, vector<1x286xf32>,
    %121 = vector.extract_strided_slice %118 {offsets = [1, 0], sizes = [1, 286], strides = [1, 1]} : vector<8x286xf32> to vector<1x286xf32>
    %c1_103 = arith.constant 1 : index
    %c384_104 = arith.constant 384 : index
    %122 = vector.load %arg7[%c1_103, %c384_104] : memref<2x3072xf32, #tpu.memory_space<vmem>>, vector<1x286xf32>
    tpu.vector_store %arg7[%c1_103, %c384_104], %121 {strides = array<i32>} : memref<2x3072xf32, #tpu.memory_space<vmem>>, vector<1x286xf32>,
    %123 = vector.extract_strided_slice %118 {offsets = [2, 0], sizes = [1, 286], strides = [1, 1]} : vector<8x286xf32> to vector<1x286xf32>
    %c1_105 = arith.constant 1 : index
    %c768_106 = arith.constant 768 : index
    %124 = vector.load %arg7[%c1_105, %c768_106] : memref<2x3072xf32, #tpu.memory_space<vmem>>, vector<1x286xf32>
    tpu.vector_store %arg7[%c1_105, %c768_106], %123 {strides = array<i32>} : memref<2x3072xf32, #tpu.memory_space<vmem>>, vector<1x286xf32>,
    %125 = vector.extract_strided_slice %118 {offsets = [3, 0], sizes = [1, 286], strides = [1, 1]} : vector<8x286xf32> to vector<1x286xf32>
    %c1_107 = arith.constant 1 : index
    %c1152_108 = arith.constant 1152 : index
    %126 = vector.load %arg7[%c1_107, %c1152_108] : memref<2x3072xf32, #tpu.memory_space<vmem>>, vector<1x286xf32>
    tpu.vector_store %arg7[%c1_107, %c1152_108], %125 {strides = array<i32>} : memref<2x3072xf32, #tpu.memory_space<vmem>>, vector<1x286xf32>,
    %127 = vector.extract_strided_slice %118 {offsets = [4, 0], sizes = [1, 286], strides = [1, 1]} : vector<8x286xf32> to vector<1x286xf32>
    %c1_109 = arith.constant 1 : index
    %c1536_110 = arith.constant 1536 : index
    %128 = vector.load %arg7[%c1_109, %c1536_110] : memref<2x3072xf32, #tpu.memory_space<vmem>>, vector<1x286xf32>
    tpu.vector_store %arg7[%c1_109, %c1536_110], %127 {strides = array<i32>} : memref<2x3072xf32, #tpu.memory_space<vmem>>, vector<1x286xf32>,
    %129 = vector.extract_strided_slice %118 {offsets = [5, 0], sizes = [1, 286], strides = [1, 1]} : vector<8x286xf32> to vector<1x286xf32>
    %c1_111 = arith.constant 1 : index
    %c1920_112 = arith.constant 1920 : index
    %130 = vector.load %arg7[%c1_111, %c1920_112] : memref<2x3072xf32, #tpu.memory_space<vmem>>, vector<1x286xf32>
    tpu.vector_store %arg7[%c1_111, %c1920_112], %129 {strides = array<i32>} : memref<2x3072xf32, #tpu.memory_space<vmem>>, vector<1x286xf32>,
    %131 = vector.extract_strided_slice %118 {offsets = [6, 0], sizes = [1, 286], strides = [1, 1]} : vector<8x286xf32> to vector<1x286xf32>
    %c1_113 = arith.constant 1 : index
    %c2304_114 = arith.constant 2304 : index
    %132 = vector.load %arg7[%c1_113, %c2304_114] : memref<2x3072xf32, #tpu.memory_space<vmem>>, vector<1x286xf32>
    tpu.vector_store %arg7[%c1_113, %c2304_114], %131 {strides = array<i32>} : memref<2x3072xf32, #tpu.memory_space<vmem>>, vector<1x286xf32>,
    %133 = vector.extract_strided_slice %118 {offsets = [7, 0], sizes = [1, 286], strides = [1, 1]} : vector<8x286xf32> to vector<1x286xf32>
    %c1_115 = arith.constant 1 : index
    %c2688_116 = arith.constant 2688 : index
    %134 = vector.load %arg7[%c1_115, %c2688_116] : memref<2x3072xf32, #tpu.memory_space<vmem>>, vector<1x286xf32>
    tpu.vector_store %arg7[%c1_115, %c2688_116], %133 {strides = array<i32>} : memref<2x3072xf32, #tpu.memory_space<vmem>>, vector<1x286xf32>,
    %c0_117 = arith.constant 0 : index
    %c0_118 = arith.constant 0 : index
    %135 = vector.load %arg7[%c0_117, %c0_118] : memref<2x3072xf32, #tpu.memory_space<vmem>>, vector<2x3072xf32>
    %c0_119 = arith.constant 0 : index
    %c0_120 = arith.constant 0 : index
    %136 = vector.load %arg4[%c0_119, %c0_120] : memref<10x3072xf32, #tpu.memory_space<vmem>>, vector<10x3072xf32>
    %cst_121 = arith.constant dense<0.000000e+00> : vector<2x10xf32>
    %137 = tpu.matmul %135, %136, %cst_121 {dimension_numbers = #tpu.dot_dimension_numbers<[1], [1], [0], [0], [0, 0, 1, 0], [], []>} : vector<2x3072xf32>, vector<10x3072xf32>, vector<2x10xf32> -> vector<2x10xf32>
    %c0_122 = arith.constant 0 : index
    %c0_123 = arith.constant 0 : index
    %138 = vector.load %arg5[%c0_122, %c0_123] : memref<1x10xf32, #tpu.memory_space<vmem>>, vector<1x10xf32>
    %139 = vector.broadcast %138 : vector<1x10xf32> to vector<2x10xf32>
    %140 = arith.addf %137, %139 : vector<2x10xf32>
    %c0_124 = arith.constant 0 : index
    %c0_125 = arith.constant 0 : index
    %141 = vector.load %arg6[%c0_124, %c0_125] : memref<2x10xf32, #tpu.memory_space<vmem>>, vector<2x10xf32>
    tpu.vector_store %arg6[%c0_124, %c0_125], %140 {strides = array<i32>} : memref<2x10xf32, #tpu.memory_space<vmem>>, vector<2x10xf32>,
    return
  }
  func.func @transform_0(%arg0: i32) -> (i32, i32) {
    %c0_i32 = arith.constant 0 : i32
    %c0_i32_0 = arith.constant 0 : i32
    %c0_i32_1 = arith.constant 0 : i32
    return %c0_i32, %c0_i32_0 : i32, i32
  }
  func.func @transform_1(%arg0: i32) -> (i32, i32, i32) {
    %c0_i32 = arith.constant 0 : i32
    %c0_i32_0 = arith.constant 0 : i32
    %c0_i32_1 = arith.constant 0 : i32
    %c0_i32_2 = arith.constant 0 : i32
    return %c0_i32, %c0_i32_0, %c0_i32_1 : i32, i32, i32
  }
  func.func @transform_2(%arg0: i32) -> (i32, i32) {
    %c0_i32 = arith.constant 0 : i32
    %c0_i32_0 = arith.constant 0 : i32
    %c0_i32_1 = arith.constant 0 : i32
    return %c0_i32, %c0_i32_0 : i32, i32
  }
  func.func @transform_3(%arg0: i32) -> (i32, i32) {
    %c0_i32 = arith.constant 0 : i32
    %c0_i32_0 = arith.constant 0 : i32
    %c0_i32_1 = arith.constant 0 : i32
    return %c0_i32, %c0_i32_0 : i32, i32
  }
  func.func @transform_4(%arg0: i32) -> (i32, i32) {
    %c0_i32 = arith.constant 0 : i32
    %c0_i32_0 = arith.constant 0 : i32
    %c0_i32_1 = arith.constant 0 : i32
    return %c0_i32, %c0_i32_0 : i32, i32
  }
  func.func @transform_5(%arg0: i32) -> (i32, i32) {
    %c0_i32 = arith.constant 0 : i32
    %c0_i32_0 = arith.constant 0 : i32
    %c0_i32_1 = arith.constant 0 : i32
    return %c0_i32, %c0_i32_0 : i32, i32
  }
  func.func @transform_6(%arg0: i32) -> (i32, i32) {
    %c0_i32 = arith.constant 0 : i32
    %c0_i32_0 = arith.constant 0 : i32
    %c0_i32_1 = arith.constant 0 : i32
    return %c0_i32, %c0_i32_0 : i32, i32
  }
}

</mosaic_0001>

<llo_original>
// kernel: _sequential_forward_impl.1
$region0: #{_sequential_forward_impl.1}
  #allocation0 [shape = 'u32[]', space=smem, size = 0x4, offset = 0x4, fixed_abs, tag = 'smem constant byte address 0x4 - core index']
  #allocation1 [shape = 'u32[72,128]{1,0:T(1,128)}', space=vmem, size = 0x9000, scoped, tag = 'internal scratch']
  %s0 = inlined_call_operand.vmem [shape: f32[4,648], index: 0, kind: input, shape index: {}]
  %s1 = inlined_call_operand.vmem [shape: f32[9,8,4], index: 1, kind: input, shape index: {}]
  %s2 = inlined_call_operand.vmem [shape: f32[8,1], index: 2, kind: input, shape index: {}]
  %s3 = inlined_call_operand.vmem [shape: f32[10,3072], index: 3, kind: input, shape index: {}]
  %s4 = inlined_call_operand.vmem [shape: f32[1,10], index: 4, kind: input, shape index: {}]
  %s5 = inlined_call_operand.hbm [shape: f32[2,10], index: 5, kind: output, shape index: {0}]
  %s6 = inlined_call_operand.vmem [shape: f32[2,3072], index: 6, kind: output, shape index: {1}]
  %7 = xla_tuple %s5, %s6
  %s8 = sld [smem:[#allocation0]]
  $region38: #{_sequential_forward_impl.1} parent=0
    _
  %s10 = ssub.s32 1, %s8
  %s11 = scalar_select 0, %s10, %s8
  $region1: #{_sequential_forward_impl.1} parent=0
    #allocation2 [shape = 'u8[1024]{0}', space=vmem, size = 0x400, scoped, tag = 'output window, operand 0, single buffered']
    #allocation3 [shape = 's32[1]{0}', space=sflag, size = 0x4, scoped, tag = 'scoped memory for _sequential_forward_impl.1']
    %12 = vsyncpa [#allocation3], 0
    // Predicated region
    $region2: #{_sequential_forward_impl.1} parent=1 // pred_check
      _
    $region3: #{_sequential_forward_impl.1} parent=1 // pred_check_branch
      %14 = sbr.rel (0) target = $region5
    $region4: #{_sequential_forward_impl.1} parent=1 // pred_region
      _
    $region5: #{_sequential_forward_impl.1} parent=1 // pred_fallthru
      _
    // Predicated region
    $region6: #{_sequential_forward_impl.1} parent=1 // pred_check
      _
    $region7: #{_sequential_forward_impl.1} parent=1 // pred_check_branch
      %16 = sbr.rel (0) target = $region9
    $region8: #{_sequential_forward_impl.1} parent=1 // pred_region
      _
    $region9: #{_sequential_forward_impl.1} parent=1 // pred_fallthru
      _
    // Predicated region
    $region10: #{_sequential_forward_impl.1} parent=1 // pred_check
      _
    $region11: #{_sequential_forward_impl.1} parent=1 // pred_check_branch
      %18 = sbr.rel (0) target = $region13
    $region12: #{_sequential_forward_impl.1} parent=1 // pred_region
      _
    $region13: #{_sequential_forward_impl.1} parent=1 // pred_fallthru
      _
    // Predicated region
    $region14: #{_sequential_forward_impl.1} parent=1 // pred_check
      _
    $region15: #{_sequential_forward_impl.1} parent=1 // pred_check_branch
      %20 = sbr.rel (0) target = $region17
    $region16: #{_sequential_forward_impl.1} parent=1 // pred_region
      _
    $region17: #{_sequential_forward_impl.1} parent=1 // pred_fallthru
      _
    // Predicated region
    $region18: #{_sequential_forward_impl.1} parent=1 // pred_check
      _
    $region19: #{_sequential_forward_impl.1} parent=1 // pred_check_branch
      %22 = sbr.rel (0) target = $region21
    $region20: #{_sequential_forward_impl.1} parent=1 // pred_region
      _
    $region21: #{_sequential_forward_impl.1} parent=1 // pred_fallthru
      _
    %23 = vst [vmem:[%s6] sm:$0xff] 0.0
    %24 = vst [vmem:[%s6 + $0x8] sm:$0xff] 0.0
    %25 = vst [vmem:[%s6 + $0x10] sm:$0xff] 0.0
    %26 = vst [vmem:[%s6 + $0x18] sm:$0xff] 0.0
    %27 = vst [vmem:[%s6 + $0x20] sm:$0xff] 0.0
    %28 = vst [vmem:[%s6 + $0x28] sm:$0xff] 0.0
    %v29 = vld [vmem:[%s2] sm:$0xff]
    %v30 = vld [vmem:[%s1] sm:$0xff]
    %v31 = vld [vmem:[%s0] sm:$0xff]
    %v32 = vld [vmem:[%s0 + $0x8] sm:$0xf]
    %s33 = scalar_lea.vmem %s1, 8
    %v34 = vld [vmem:[%s33] sm:$0xff]
    %37 = vst [vmem:[#allocation1] ss:$2 sm:$0xff] %v31
    %s38 = scalar_lea.vmem [#allocation1], 16
    %39 = vst [vmem:[%s38] ss:$2 sm:$0xff] %v32
    %v40 = vld.sshfl [vmem:[#allocation1] sm:$0xff pattern:$0x75316420]
    %v41 = vld.sshfl [vmem:[#allocation1 + $0x8] sm:$0xff pattern:$0x75316420]
    %v42 = vld.sshfl [vmem:[#allocation1 + $0x10] sm:$0xff pattern:$0x75316420]
    %43 = vrot.lane.b32.xlu0 %v40, 127
    %v44 = vpop.permute.xlu0 %43
    %45 = vrot.lane.b32.xlu0 %v41, 127
    %v46 = vpop.permute.xlu0 %45
    %47 = vrot.lane.b32.xlu0 %v42, 127
    %v48 = vpop.permute.xlu0 %47
    %vm49 = vcmask 1039360
    %v50 = vsel %vm49, %v44, %v46
    %v51 = vsel %vm49, %v46, %v48
    %vm52 = vcmask 31744
    %v54 = vsel %vm52, %v34, 0
    %vm56 = vcmask 1043456
    %v57 = vsel %vm56, %v50, 0
    %v59 = vsel %vm56, %v51, 0
    %v61 = vsel %vm56, %v48, 0
    %63 = vmatpush.msra.mxu0 0.0
    %64 = vmatpush.msra.mxu0 0.0
    %65 = vmatpush.msra.mxu0 0.0
    %66 = vmatpush.msra.mxu0 0.0
    %67 = vmatpush.msra.mxu0 0.0
    %68 = vmatpush.msra.mxu0 0.0
    %69 = vmatpush.msra.mxu0 0.0
    %70 = vmatpush.msra.mxu0 0.0
    %71 = vmatpush.msra.mxu0 0.0
    %72 = vmatpush.msra.mxu0 0.0
    %73 = vmatpush.msra.mxu0 0.0
    %74 = vmatpush.msra.mxu0 0.0
    %75 = vmatpush.msra.mxu0 0.0
    %76 = vmatpush.msra.mxu0 0.0
    %77 = vmatpush.msra.mxu0 0.0
    %78 = vmatpush.msra.mxu0 %v57
    %79 = vmatmul.f32.gmra.mxu0 %v54
    %v80 = vpop.f32.mrf.mxu0
    %v81 = vadd.f32 0.0, %v80
    %82 = vdwg.mxu0
    %83 = vmatpush.msra.mxu0 0.0
    %84 = vmatpush.msra.mxu0 0.0
    %85 = vmatpush.msra.mxu0 0.0
    %86 = vmatpush.msra.mxu0 0.0
    %87 = vmatpush.msra.mxu0 0.0
    %88 = vmatpush.msra.mxu0 0.0
    %89 = vmatpush.msra.mxu0 0.0
    %90 = vmatpush.msra.mxu0 0.0
    %91 = vmatpush.msra.mxu0 0.0
    %92 = vmatpush.msra.mxu0 0.0
    %93 = vmatpush.msra.mxu0 0.0
    %94 = vmatpush.msra.mxu0 0.0
    %95 = vmatpush.msra.mxu0 0.0
    %96 = vmatpush.msra.mxu0 0.0
    %97 = vmatpush.msra.mxu0 0.0
    %98 = vmatpush.msra.mxu0 %v59
    %99 = vmatmul.f32.gmra.mxu0 %v54
    %v100 = vpop.f32.mrf.mxu0
    %v101 = vadd.f32 0.0, %v100
    %102 = vdwg.mxu0
    %103 = vmatpush.msra.mxu0 0.0
    %104 = vmatpush.msra.mxu0 0.0
    %105 = vmatpush.msra.mxu0 0.0
    %106 = vmatpush.msra.mxu0 0.0
    %107 = vmatpush.msra.mxu0 0.0
    %108 = vmatpush.msra.mxu0 0.0
    %109 = vmatpush.msra.mxu0 0.0
    %110 = vmatpush.msra.mxu0 0.0
    %111 = vmatpush.msra.mxu0 0.0
    %112 = vmatpush.msra.mxu0 0.0
    %113 = vmatpush.msra.mxu0 0.0
    %114 = vmatpush.msra.mxu0 0.0
    %115 = vmatpush.msra.mxu0 0.0
    %116 = vmatpush.msra.mxu0 0.0
    %117 = vmatpush.msra.mxu0 0.0
    %118 = vmatpush.msra.mxu0 %v61
    %119 = vmatmul.f32.gmra.mxu0 %v54
    %v120 = vpop.f32.mrf.mxu0
    %v121 = vadd.f32 0.0, %v120
    %122 = vdwg.mxu0
    %123 = vst [vmem:[#allocation1] ss:$2 sm:$0xff] %v31
    %s124 = scalar_lea.vmem [#allocation1], 16
    %125 = vst [vmem:[%s124] ss:$2 sm:$0xff] %v32
    %v126 = vld.sshfl [vmem:[#allocation1] sm:$0xff pattern:$0x75316420]
    %v127 = vld.sshfl [vmem:[#allocation1 + $0x8] sm:$0xff pattern:$0x75316420]
    %v128 = vld.sshfl [vmem:[#allocation1 + $0x10] sm:$0xff pattern:$0x75316420]
    %v130 = vsel %vm52, %v30, 0
    %v132 = vsel %vm56, %v126, 0
    %v134 = vsel %vm56, %v127, 0
    %v136 = vsel %vm56, %v128, 0
    %138 = vmatpush.msra.mxu0 0.0
    %139 = vmatpush.msra.mxu0 0.0
    %140 = vmatpush.msra.mxu0 0.0
    %141 = vmatpush.msra.mxu0 0.0
    %142 = vmatpush.msra.mxu0 0.0
    %143 = vmatpush.msra.mxu0 0.0
    %144 = vmatpush.msra.mxu0 0.0
    %145 = vmatpush.msra.mxu0 0.0
    %146 = vmatpush.msra.mxu0 0.0
    %147 = vmatpush.msra.mxu0 0.0
    %148 = vmatpush.msra.mxu0 0.0
    %149 = vmatpush.msra.mxu0 0.0
    %150 = vmatpush.msra.mxu0 0.0
    %151 = vmatpush.msra.mxu0 0.0
    %152 = vmatpush.msra.mxu0 0.0
    %153 = vmatpush.msra.mxu0 %v132
    %154 = vmatmul.f32.gmra.mxu0 %v130
    %v155 = vpop.f32.mrf.mxu0
    %v156 = vadd.f32 %v81, %v155
    %157 = vdwg.mxu0
    %158 = vmatpush.msra.mxu0 0.0
    %159 = vmatpush.msra.mxu0 0.0
    %160 = vmatpush.msra.mxu0 0.0
    %161 = vmatpush.msra.mxu0 0.0
    %162 = vmatpush.msra.mxu0 0.0
    %163 = vmatpush.msra.mxu0 0.0
    %164 = vmatpush.msra.mxu0 0.0
    %165 = vmatpush.msra.mxu0 0.0
    %166 = vmatpush.msra.mxu0 0.0
    %167 = vmatpush.msra.mxu0 0.0
    %168 = vmatpush.msra.mxu0 0.0
    %169 = vmatpush.msra.mxu0 0.0
    %170 = vmatpush.msra.mxu0 0.0
    %171 = vmatpush.msra.mxu0 0.0
    %172 = vmatpush.msra.mxu0 0.0
    %173 = vmatpush.msra.mxu0 %v134
    %174 = vmatmul.f32.gmra.mxu0 %v130
    %v175 = vpop.f32.mrf.mxu0
    %v176 = vadd.f32 %v101, %v175
    %177 = vdwg.mxu0
    %178 = vmatpush.msra.mxu0 0.0
    %179 = vmatpush.msra.mxu0 0.0
    %180 = vmatpush.msra.mxu0 0.0
    %181 = vmatpush.msra.mxu0 0.0
    %182 = vmatpush.msra.mxu0 0.0
    %183 = vmatpush.msra.mxu0 0.0
    %184 = vmatpush.msra.mxu0 0.0
    %185 = vmatpush.msra.mxu0 0.0
    %186 = vmatpush.msra.mxu0 0.0
    %187 = vmatpush.msra.mxu0 0.0
    %188 = vmatpush.msra.mxu0 0.0
    %189 = vmatpush.msra.mxu0 0.0
    %190 = vmatpush.msra.mxu0 0.0
    %191 = vmatpush.msra.mxu0 0.0
    %192 = vmatpush.msra.mxu0 0.0
    %193 = vmatpush.msra.mxu0 %v136
    %194 = vmatmul.f32.gmra.mxu0 %v130
    %v195 = vpop.f32.mrf.mxu0
    %v196 = vadd.f32 %v121, %v195
    %197 = vdwg.mxu0
    %s198 = scalar_lea.vmem %s1, 16
    %v199 = vld [vmem:[%s198] sm:$0xff]
    %v200 = vld [vmem:[%s0] sm:$0xff]
    %v201 = vld [vmem:[%s0 + $0x8] sm:$0xf]
    %204 = vst [vmem:[#allocation1] ss:$2 sm:$0xff] %v200
    %s205 = scalar_lea.vmem [#allocation1], 16
    %206 = vst [vmem:[%s205] ss:$2 sm:$0xff] %v201
    %v207 = vld.sshfl [vmem:[#allocation1] sm:$0xff pattern:$0x75316420]
    %v208 = vld.sshfl [vmem:[#allocation1 + $0x8] sm:$0xff pattern:$0x75316420]
    %v209 = vld.sshfl [vmem:[#allocation1 + $0x10] sm:$0xff pattern:$0x75316420]
    %210 = vrot.lane.b32.xlu0 %v207, 126
    %v211 = vpop.permute.xlu0 %210
    %212 = vrot.lane.b32.xlu0 %v208, 126
    %v213 = vpop.permute.xlu0 %212
    %214 = vrot.lane.b32.xlu0 %v209, 126
    %v215 = vpop.permute.xlu0 %214
    %vm216 = vcmask 1031168
    %v217 = vsel %vm216, %v211, %v213
    %v218 = vsel %vm216, %v213, %v215
    %v220 = vsel %vm52, %v199, 0
    %v222 = vsel %vm56, %v217, 0
    %v224 = vsel %vm56, %v218, 0
    %v226 = vsel %vm56, %v215, 0
    %228 = vmatpush.msra.mxu0 0.0
    %229 = vmatpush.msra.mxu0 0.0
    %230 = vmatpush.msra.mxu0 0.0
    %231 = vmatpush.msra.mxu0 0.0
    %232 = vmatpush.msra.mxu0 0.0
    %233 = vmatpush.msra.mxu0 0.0
    %234 = vmatpush.msra.mxu0 0.0
    %235 = vmatpush.msra.mxu0 0.0
    %236 = vmatpush.msra.mxu0 0.0
    %237 = vmatpush.msra.mxu0 0.0
    %238 = vmatpush.msra.mxu0 0.0
    %239 = vmatpush.msra.mxu0 0.0
    %240 = vmatpush.msra.mxu0 0.0
    %241 = vmatpush.msra.mxu0 0.0
    %242 = vmatpush.msra.mxu0 0.0
    %243 = vmatpush.msra.mxu0 %v222
    %244 = vmatmul.f32.gmra.mxu0 %v220
    %v245 = vpop.f32.mrf.mxu0
    %v246 = vadd.f32 0.0, %v245
    %247 = vdwg.mxu0
    %248 = vmatpush.msra.mxu0 0.0
    %249 = vmatpush.msra.mxu0 0.0
    %250 = vmatpush.msra.mxu0 0.0
    %251 = vmatpush.msra.mxu0 0.0
    %252 = vmatpush.msra.mxu0 0.0
    %253 = vmatpush.msra.mxu0 0.0
    %254 = vmatpush.msra.mxu0 0.0
    %255 = vmatpush.msra.mxu0 0.0
    %256 = vmatpush.msra.mxu0 0.0
    %257 = vmatpush.msra.mxu0 0.0
    %258 = vmatpush.msra.mxu0 0.0
    %259 = vmatpush.msra.mxu0 0.0
    %260 = vmatpush.msra.mxu0 0.0
    %261 = vmatpush.msra.mxu0 0.0
    %262 = vmatpush.msra.mxu0 0.0
    %263 = vmatpush.msra.mxu0 %v224
    %264 = vmatmul.f32.gmra.mxu0 %v220
    %v265 = vpop.f32.mrf.mxu0
    %v266 = vadd.f32 0.0, %v265
    %267 = vdwg.mxu0
    %268 = vmatpush.msra.mxu0 0.0
    %269 = vmatpush.msra.mxu0 0.0
    %270 = vmatpush.msra.mxu0 0.0
    %271 = vmatpush.msra.mxu0 0.0
    %272 = vmatpush.msra.mxu0 0.0
    %273 = vmatpush.msra.mxu0 0.0
    %274 = vmatpush.msra.mxu0 0.0
    %275 = vmatpush.msra.mxu0 0.0
    %276 = vmatpush.msra.mxu0 0.0
    %277 = vmatpush.msra.mxu0 0.0
    %278 = vmatpush.msra.mxu0 0.0
    %279 = vmatpush.msra.mxu0 0.0
    %280 = vmatpush.msra.mxu0 0.0
    %281 = vmatpush.msra.mxu0 0.0
    %282 = vmatpush.msra.mxu0 0.0
    %283 = vmatpush.msra.mxu0 %v226
    %284 = vmatmul.f32.gmra.mxu0 %v220
    %v285 = vpop.f32.mrf.mxu0
    %v286 = vadd.f32 0.0, %v285
    %287 = vdwg.mxu0
    %v288 = vadd.f32 %v156, %v246
    %v289 = vadd.f32 %v176, %v266
    %v290 = vadd.f32 %v196, %v286
    %s291 = scalar_lea.vmem %s1, 24
    %v292 = vld [vmem:[%s291] sm:$0xff]
    %v293 = vld [vmem:[%s0] sm:$0xff]
    %v294 = vld [vmem:[%s0 + $0x8] sm:$0xf]
    %297 = vst [vmem:[#allocation1] ss:$2 sm:$0xff] %v293
    %s298 = scalar_lea.vmem [#allocation1], 16
    %299 = vst [vmem:[%s298] ss:$2 sm:$0xff] %v294
    %v300 = vld.sshfl [vmem:[#allocation1] sm:$0xff pattern:$0x75316420]
    %v301 = vld.sshfl [vmem:[#allocation1 + $0x8] sm:$0xff pattern:$0x75316420]
    %v302 = vld.sshfl [vmem:[#allocation1 + $0x10] sm:$0xff pattern:$0x75316420]
    %303 = vrot.lane.b32.xlu0 %v300, 110
    %v304 = vpop.permute.xlu0 %303
    %305 = vrot.lane.b32.xlu0 %v301, 110
    %v306 = vpop.permute.xlu0 %305
    %307 = vrot.lane.b32.xlu0 %v302, 110
    %v308 = vpop.permute.xlu0 %307
    %vm309 = vcmask 900096
    %v310 = vsel %vm309, %v304, %v306
    %v311 = vsel %vm309, %v306, %v308
    %v313 = vsel %vm52, %v292, 0
    %v315 = vsel %vm56, %v310, 0
    %v317 = vsel %vm56, %v311, 0
    %v319 = vsel %vm56, %v308, 0
    %321 = vmatpush.msra.mxu0 0.0
    %322 = vmatpush.msra.mxu0 0.0
    %323 = vmatpush.msra.mxu0 0.0
    %324 = vmatpush.msra.mxu0 0.0
    %325 = vmatpush.msra.mxu0 0.0
    %326 = vmatpush.msra.mxu0 0.0
    %327 = vmatpush.msra.mxu0 0.0
    %328 = vmatpush.msra.mxu0 0.0
    %329 = vmatpush.msra.mxu0 0.0
    %330 = vmatpush.msra.mxu0 0.0
    %331 = vmatpush.msra.mxu0 0.0
    %332 = vmatpush.msra.mxu0 0.0
    %333 = vmatpush.msra.mxu0 0.0
    %334 = vmatpush.msra.mxu0 0.0
    %335 = vmatpush.msra.mxu0 0.0
    %336 = vmatpush.msra.mxu0 %v315
    %337 = vmatmul.f32.gmra.mxu0 %v313
    %v338 = vpop.f32.mrf.mxu0
    %v339 = vadd.f32 0.0, %v338
    %340 = vdwg.mxu0
    %341 = vmatpush.msra.mxu0 0.0
    %342 = vmatpush.msra.mxu0 0.0
    %343 = vmatpush.msra.mxu0 0.0
    %344 = vmatpush.msra.mxu0 0.0
    %345 = vmatpush.msra.mxu0 0.0
    %346 = vmatpush.msra.mxu0 0.0
    %347 = vmatpush.msra.mxu0 0.0
    %348 = vmatpush.msra.mxu0 0.0
    %349 = vmatpush.msra.mxu0 0.0
    %350 = vmatpush.msra.mxu0 0.0
    %351 = vmatpush.msra.mxu0 0.0
    %352 = vmatpush.msra.mxu0 0.0
    %353 = vmatpush.msra.mxu0 0.0
    %354 = vmatpush.msra.mxu0 0.0
    %355 = vmatpush.msra.mxu0 0.0
    %356 = vmatpush.msra.mxu0 %v317
    %357 = vmatmul.f32.gmra.mxu0 %v313
    %v358 = vpop.f32.mrf.mxu0
    %v359 = vadd.f32 0.0, %v358
    %360 = vdwg.mxu0
    %361 = vmatpush.msra.mxu0 0.0
    %362 = vmatpush.msra.mxu0 0.0
    %363 = vmatpush.msra.mxu0 0.0
    %364 = vmatpush.msra.mxu0 0.0
    %365 = vmatpush.msra.mxu0 0.0
    %366 = vmatpush.msra.mxu0 0.0
    %367 = vmatpush.msra.mxu0 0.0
    %368 = vmatpush.msra.mxu0 0.0
    %369 = vmatpush.msra.mxu0 0.0
    %370 = vmatpush.msra.mxu0 0.0
    %371 = vmatpush.msra.mxu0 0.0
    %372 = vmatpush.msra.mxu0 0.0
    %373 = vmatpush.msra.mxu0 0.0
    %374 = vmatpush.msra.mxu0 0.0
    %375 = vmatpush.msra.mxu0 0.0
    %376 = vmatpush.msra.mxu0 %v319
    %377 = vmatmul.f32.gmra.mxu0 %v313
    %v378 = vpop.f32.mrf.mxu0
    %v379 = vadd.f32 0.0, %v378
    %380 = vdwg.mxu0
    %v381 = vadd.f32 %v288, %v339
    %v382 = vadd.f32 %v289, %v359
    %v383 = vadd.f32 %v290, %v379
    %s384 = scalar_lea.vmem %s1, 32
    %v385 = vld [vmem:[%s384] sm:$0xff]
    %v386 = vld [vmem:[%s0] sm:$0xff]
    %v387 = vld [vmem:[%s0 + $0x8] sm:$0xf]
    %390 = vst [vmem:[#allocation1] ss:$2 sm:$0xff] %v386
    %s391 = scalar_lea.vmem [#allocation1], 16
    %392 = vst [vmem:[%s391] ss:$2 sm:$0xff] %v387
    %v393 = vld.sshfl [vmem:[#allocation1] sm:$0xff pattern:$0x75316420]
    %v394 = vld.sshfl [vmem:[#allocation1 + $0x8] sm:$0xff pattern:$0x75316420]
    %v395 = vld.sshfl [vmem:[#allocation1 + $0x10] sm:$0xff pattern:$0x75316420]
    %396 = vrot.lane.b32.xlu0 %v393, 109
    %v397 = vpop.permute.xlu0 %396
    %398 = vrot.lane.b32.xlu0 %v394, 109
    %v399 = vpop.permute.xlu0 %398
    %400 = vrot.lane.b32.xlu0 %v395, 109
    %v401 = vpop.permute.xlu0 %400
    %vm402 = vcmask 891904
    %v403 = vsel %vm402, %v397, %v399
    %v404 = vsel %vm402, %v399, %v401
    %v406 = vsel %vm52, %v385, 0
    %v408 = vsel %vm56, %v403, 0
    %v410 = vsel %vm56, %v404, 0
    %v412 = vsel %vm56, %v401, 0
    %414 = vmatpush.msra.mxu0 0.0
    %415 = vmatpush.msra.mxu0 0.0
    %416 = vmatpush.msra.mxu0 0.0
    %417 = vmatpush.msra.mxu0 0.0
    %418 = vmatpush.msra.mxu0 0.0
    %419 = vmatpush.msra.mxu0 0.0
    %420 = vmatpush.msra.mxu0 0.0
    %421 = vmatpush.msra.mxu0 0.0
    %422 = vmatpush.msra.mxu0 0.0
    %423 = vmatpush.msra.mxu0 0.0
    %424 = vmatpush.msra.mxu0 0.0
    %425 = vmatpush.msra.mxu0 0.0
    %426 = vmatpush.msra.mxu0 0.0
    %427 = vmatpush.msra.mxu0 0.0
    %428 = vmatpush.msra.mxu0 0.0
    %429 = vmatpush.msra.mxu0 %v408
    %430 = vmatmul.f32.gmra.mxu0 %v406
    %v431 = vpop.f32.mrf.mxu0
    %v432 = vadd.f32 0.0, %v431
    %433 = vdwg.mxu0
    %434 = vmatpush.msra.mxu0 0.0
    %435 = vmatpush.msra.mxu0 0.0
    %436 = vmatpush.msra.mxu0 0.0
    %437 = vmatpush.msra.mxu0 0.0
    %438 = vmatpush.msra.mxu0 0.0
    %439 = vmatpush.msra.mxu0 0.0
    %440 = vmatpush.msra.mxu0 0.0
    %441 = vmatpush.msra.mxu0 0.0
    %442 = vmatpush.msra.mxu0 0.0
    %443 = vmatpush.msra.mxu0 0.0
    %444 = vmatpush.msra.mxu0 0.0
    %445 = vmatpush.msra.mxu0 0.0
    %446 = vmatpush.msra.mxu0 0.0
    %447 = vmatpush.msra.mxu0 0.0
    %448 = vmatpush.msra.mxu0 0.0
    %449 = vmatpush.msra.mxu0 %v410
    %450 = vmatmul.f32.gmra.mxu0 %v406
    %v451 = vpop.f32.mrf.mxu0
    %v452 = vadd.f32 0.0, %v451
    %453 = vdwg.mxu0
    %454 = vmatpush.msra.mxu0 0.0
    %455 = vmatpush.msra.mxu0 0.0
    %456 = vmatpush.msra.mxu0 0.0
    %457 = vmatpush.msra.mxu0 0.0
    %458 = vmatpush.msra.mxu0 0.0
    %459 = vmatpush.msra.mxu0 0.0
    %460 = vmatpush.msra.mxu0 0.0
    %461 = vmatpush.msra.mxu0 0.0
    %462 = vmatpush.msra.mxu0 0.0
    %463 = vmatpush.msra.mxu0 0.0
    %464 = vmatpush.msra.mxu0 0.0
    %465 = vmatpush.msra.mxu0 0.0
    %466 = vmatpush.msra.mxu0 0.0
    %467 = vmatpush.msra.mxu0 0.0
    %468 = vmatpush.msra.mxu0 0.0
    %469 = vmatpush.msra.mxu0 %v412
    %470 = vmatmul.f32.gmra.mxu0 %v406
    %v471 = vpop.f32.mrf.mxu0
    %v472 = vadd.f32 0.0, %v471
    %473 = vdwg.mxu0
    %v474 = vadd.f32 %v381, %v432
    %v475 = vadd.f32 %v382, %v452
    %v476 = vadd.f32 %v383, %v472
    %s477 = scalar_lea.vmem %s1, 40
    %v478 = vld [vmem:[%s477] sm:$0xff]
    %v479 = vld [vmem:[%s0] sm:$0xff]
    %v480 = vld [vmem:[%s0 + $0x8] sm:$0xf]
    %483 = vst [vmem:[#allocation1] ss:$2 sm:$0xff] %v479
    %s484 = scalar_lea.vmem [#allocation1], 16
    %485 = vst [vmem:[%s484] ss:$2 sm:$0xff] %v480
    %v486 = vld.sshfl [vmem:[#allocation1] sm:$0xff pattern:$0x75316420]
    %v487 = vld.sshfl [vmem:[#allocation1 + $0x8] sm:$0xff pattern:$0x75316420]
    %v488 = vld.sshfl [vmem:[#allocation1 + $0x10] sm:$0xff pattern:$0x75316420]
    %489 = vrot.lane.b32.xlu0 %v486, 108
    %v490 = vpop.permute.xlu0 %489
    %491 = vrot.lane.b32.xlu0 %v487, 108
    %v492 = vpop.permute.xlu0 %491
    %493 = vrot.lane.b32.xlu0 %v488, 108
    %v494 = vpop.permute.xlu0 %493
    %vm495 = vcmask 883712
    %v496 = vsel %vm495, %v490, %v492
    %v497 = vsel %vm495, %v492, %v494
    %v499 = vsel %vm52, %v478, 0
    %v501 = vsel %vm56, %v496, 0
    %v503 = vsel %vm56, %v497, 0
    %v505 = vsel %vm56, %v494, 0
    %507 = vmatpush.msra.mxu0 0.0
    %508 = vmatpush.msra.mxu0 0.0
    %509 = vmatpush.msra.mxu0 0.0
    %510 = vmatpush.msra.mxu0 0.0
    %511 = vmatpush.msra.mxu0 0.0
    %512 = vmatpush.msra.mxu0 0.0
    %513 = vmatpush.msra.mxu0 0.0
    %514 = vmatpush.msra.mxu0 0.0
    %515 = vmatpush.msra.mxu0 0.0
    %516 = vmatpush.msra.mxu0 0.0
    %517 = vmatpush.msra.mxu0 0.0
    %518 = vmatpush.msra.mxu0 0.0
    %519 = vmatpush.msra.mxu0 0.0
    %520 = vmatpush.msra.mxu0 0.0
    %521 = vmatpush.msra.mxu0 0.0
    %522 = vmatpush.msra.mxu0 %v501
    %523 = vmatmul.f32.gmra.mxu0 %v499
    %v524 = vpop.f32.mrf.mxu0
    %v525 = vadd.f32 0.0, %v524
    %526 = vdwg.mxu0
    %527 = vmatpush.msra.mxu0 0.0
    %528 = vmatpush.msra.mxu0 0.0
    %529 = vmatpush.msra.mxu0 0.0
    %530 = vmatpush.msra.mxu0 0.0
    %531 = vmatpush.msra.mxu0 0.0
    %532 = vmatpush.msra.mxu0 0.0
    %533 = vmatpush.msra.mxu0 0.0
    %534 = vmatpush.msra.mxu0 0.0
    %535 = vmatpush.msra.mxu0 0.0
    %536 = vmatpush.msra.mxu0 0.0
    %537 = vmatpush.msra.mxu0 0.0
    %538 = vmatpush.msra.mxu0 0.0
    %539 = vmatpush.msra.mxu0 0.0
    %540 = vmatpush.msra.mxu0 0.0
    %541 = vmatpush.msra.mxu0 0.0
    %542 = vmatpush.msra.mxu0 %v503
    %543 = vmatmul.f32.gmra.mxu0 %v499
    %v544 = vpop.f32.mrf.mxu0
    %v545 = vadd.f32 0.0, %v544
    %546 = vdwg.mxu0
    %547 = vmatpush.msra.mxu0 0.0
    %548 = vmatpush.msra.mxu0 0.0
    %549 = vmatpush.msra.mxu0 0.0
    %550 = vmatpush.msra.mxu0 0.0
    %551 = vmatpush.msra.mxu0 0.0
    %552 = vmatpush.msra.mxu0 0.0
    %553 = vmatpush.msra.mxu0 0.0
    %554 = vmatpush.msra.mxu0 0.0
    %555 = vmatpush.msra.mxu0 0.0
    %556 = vmatpush.msra.mxu0 0.0
    %557 = vmatpush.msra.mxu0 0.0
    %558 = vmatpush.msra.mxu0 0.0
    %559 = vmatpush.msra.mxu0 0.0
    %560 = vmatpush.msra.mxu0 0.0
    %561 = vmatpush.msra.mxu0 0.0
    %562 = vmatpush.msra.mxu0 %v505
    %563 = vmatmul.f32.gmra.mxu0 %v499
    %v564 = vpop.f32.mrf.mxu0
    %v565 = vadd.f32 0.0, %v564
    %566 = vdwg.mxu0
    %v567 = vadd.f32 %v474, %v525
    %v568 = vadd.f32 %v475, %v545
    %v569 = vadd.f32 %v476, %v565
    %s570 = scalar_lea.vmem %s1, 48
    %v571 = vld [vmem:[%s570] sm:$0xff]
    %v572 = vld [vmem:[%s0] sm:$0xff]
    %v573 = vld [vmem:[%s0 + $0x8] sm:$0xf]
    %576 = vst [vmem:[#allocation1] ss:$2 sm:$0xff] %v572
    %s577 = scalar_lea.vmem [#allocation1], 16
    %578 = vst [vmem:[%s577] ss:$2 sm:$0xff] %v573
    %v579 = vld.sshfl [vmem:[#allocation1] sm:$0xff pattern:$0x75316420]
    %v580 = vld.sshfl [vmem:[#allocation1 + $0x8] sm:$0xff pattern:$0x75316420]
    %v581 = vld.sshfl [vmem:[#allocation1 + $0x10] sm:$0xff pattern:$0x75316420]
    %582 = vrot.lane.b32.xlu0 %v579, 92
    %v583 = vpop.permute.xlu0 %582
    %584 = vrot.lane.b32.xlu0 %v580, 92
    %v585 = vpop.permute.xlu0 %584
    %586 = vrot.lane.b32.xlu0 %v581, 92
    %v587 = vpop.permute.xlu0 %586
    %vm588 = vcmask 752640
    %v589 = vsel %vm588, %v583, %v585
    %v590 = vsel %vm588, %v585, %v587
    %v592 = vsel %vm52, %v571, 0
    %v594 = vsel %vm56, %v589, 0
    %v596 = vsel %vm56, %v590, 0
    %v598 = vsel %vm56, %v587, 0
    %600 = vmatpush.msra.mxu0 0.0
    %601 = vmatpush.msra.mxu0 0.0
    %602 = vmatpush.msra.mxu0 0.0
    %603 = vmatpush.msra.mxu0 0.0
    %604 = vmatpush.msra.mxu0 0.0
    %605 = vmatpush.msra.mxu0 0.0
    %606 = vmatpush.msra.mxu0 0.0
    %607 = vmatpush.msra.mxu0 0.0
    %608 = vmatpush.msra.mxu0 0.0
    %609 = vmatpush.msra.mxu0 0.0
    %610 = vmatpush.msra.mxu0 0.0
    %611 = vmatpush.msra.mxu0 0.0
    %612 = vmatpush.msra.mxu0 0.0
    %613 = vmatpush.msra.mxu0 0.0
    %614 = vmatpush.msra.mxu0 0.0
    %615 = vmatpush.msra.mxu0 %v594
    %616 = vmatmul.f32.gmra.mxu0 %v592
    %v617 = vpop.f32.mrf.mxu0
    %v618 = vadd.f32 0.0, %v617
    %619 = vdwg.mxu0
    %620 = vmatpush.msra.mxu0 0.0
    %621 = vmatpush.msra.mxu0 0.0
    %622 = vmatpush.msra.mxu0 0.0
    %623 = vmatpush.msra.mxu0 0.0
    %624 = vmatpush.msra.mxu0 0.0
    %625 = vmatpush.msra.mxu0 0.0
    %626 = vmatpush.msra.mxu0 0.0
    %627 = vmatpush.msra.mxu0 0.0
    %628 = vmatpush.msra.mxu0 0.0
    %629 = vmatpush.msra.mxu0 0.0
    %630 = vmatpush.msra.mxu0 0.0
    %631 = vmatpush.msra.mxu0 0.0
    %632 = vmatpush.msra.mxu0 0.0
    %633 = vmatpush.msra.mxu0 0.0
    %634 = vmatpush.msra.mxu0 0.0
    %635 = vmatpush.msra.mxu0 %v596
    %636 = vmatmul.f32.gmra.mxu0 %v592
    %v637 = vpop.f32.mrf.mxu0
    %v638 = vadd.f32 0.0, %v637
    %639 = vdwg.mxu0
    %640 = vmatpush.msra.mxu0 0.0
    %641 = vmatpush.msra.mxu0 0.0
    %642 = vmatpush.msra.mxu0 0.0
    %643 = vmatpush.msra.mxu0 0.0
    %644 = vmatpush.msra.mxu0 0.0
    %645 = vmatpush.msra.mxu0 0.0
    %646 = vmatpush.msra.mxu0 0.0
    %647 = vmatpush.msra.mxu0 0.0
    %648 = vmatpush.msra.mxu0 0.0
    %649 = vmatpush.msra.mxu0 0.0
    %650 = vmatpush.msra.mxu0 0.0
    %651 = vmatpush.msra.mxu0 0.0
    %652 = vmatpush.msra.mxu0 0.0
    %653 = vmatpush.msra.mxu0 0.0
    %654 = vmatpush.msra.mxu0 0.0
    %655 = vmatpush.msra.mxu0 %v598
    %656 = vmatmul.f32.gmra.mxu0 %v592
    %v657 = vpop.f32.mrf.mxu0
    %v658 = vadd.f32 0.0, %v657
    %659 = vdwg.mxu0
    %v660 = vadd.f32 %v567, %v618
    %v661 = vadd.f32 %v568, %v638
    %v662 = vadd.f32 %v569, %v658
    %s663 = scalar_lea.vmem %s1, 56
    %v664 = vld [vmem:[%s663] sm:$0xff]
    %v665 = vld [vmem:[%s0] sm:$0xff]
    %v666 = vld [vmem:[%s0 + $0x8] sm:$0xf]
    %669 = vst [vmem:[#allocation1] ss:$2 sm:$0xff] %v665
    %s670 = scalar_lea.vmem [#allocation1], 16
    %671 = vst [vmem:[%s670] ss:$2 sm:$0xff] %v666
    %v672 = vld.sshfl [vmem:[#allocation1] sm:$0xff pattern:$0x75316420]
    %v673 = vld.sshfl [vmem:[#allocation1 + $0x8] sm:$0xff pattern:$0x75316420]
    %v674 = vld.sshfl [vmem:[#allocation1 + $0x10] sm:$0xff pattern:$0x75316420]
    %675 = vrot.lane.b32.xlu0 %v672, 91
    %v676 = vpop.permute.xlu0 %675
    %677 = vrot.lane.b32.xlu0 %v673, 91
    %v678 = vpop.permute.xlu0 %677
    %679 = vrot.lane.b32.xlu0 %v674, 91
    %v680 = vpop.permute.xlu0 %679
    %vm681 = vcmask 744448
    %v682 = vsel %vm681, %v676, %v678
    %v683 = vsel %vm681, %v678, %v680
    %v685 = vsel %vm52, %v664, 0
    %v687 = vsel %vm56, %v682, 0
    %v689 = vsel %vm56, %v683, 0
    %v691 = vsel %vm56, %v680, 0
    %693 = vmatpush.msra.mxu0 0.0
    %694 = vmatpush.msra.mxu0 0.0
    %695 = vmatpush.msra.mxu0 0.0
    %696 = vmatpush.msra.mxu0 0.0
    %697 = vmatpush.msra.mxu0 0.0
    %698 = vmatpush.msra.mxu0 0.0
    %699 = vmatpush.msra.mxu0 0.0
    %700 = vmatpush.msra.mxu0 0.0
    %701 = vmatpush.msra.mxu0 0.0
    %702 = vmatpush.msra.mxu0 0.0
    %703 = vmatpush.msra.mxu0 0.0
    %704 = vmatpush.msra.mxu0 0.0
    %705 = vmatpush.msra.mxu0 0.0
    %706 = vmatpush.msra.mxu0 0.0
    %707 = vmatpush.msra.mxu0 0.0
    %708 = vmatpush.msra.mxu0 %v687
    %709 = vmatmul.f32.gmra.mxu0 %v685
    %v710 = vpop.f32.mrf.mxu0
    %v711 = vadd.f32 0.0, %v710
    %712 = vdwg.mxu0
    %713 = vmatpush.msra.mxu0 0.0
    %714 = vmatpush.msra.mxu0 0.0
    %715 = vmatpush.msra.mxu0 0.0
    %716 = vmatpush.msra.mxu0 0.0
    %717 = vmatpush.msra.mxu0 0.0
    %718 = vmatpush.msra.mxu0 0.0
    %719 = vmatpush.msra.mxu0 0.0
    %720 = vmatpush.msra.mxu0 0.0
    %721 = vmatpush.msra.mxu0 0.0
    %722 = vmatpush.msra.mxu0 0.0
    %723 = vmatpush.msra.mxu0 0.0
    %724 = vmatpush.msra.mxu0 0.0
    %725 = vmatpush.msra.mxu0 0.0
    %726 = vmatpush.msra.mxu0 0.0
    %727 = vmatpush.msra.mxu0 0.0
    %728 = vmatpush.msra.mxu0 %v689
    %729 = vmatmul.f32.gmra.mxu0 %v685
    %v730 = vpop.f32.mrf.mxu0
    %v731 = vadd.f32 0.0, %v730
    %732 = vdwg.mxu0
    %733 = vmatpush.msra.mxu0 0.0
    %734 = vmatpush.msra.mxu0 0.0
    %735 = vmatpush.msra.mxu0 0.0
    %736 = vmatpush.msra.mxu0 0.0
    %737 = vmatpush.msra.mxu0 0.0
    %738 = vmatpush.msra.mxu0 0.0
    %739 = vmatpush.msra.mxu0 0.0
    %740 = vmatpush.msra.mxu0 0.0
    %741 = vmatpush.msra.mxu0 0.0
    %742 = vmatpush.msra.mxu0 0.0
    %743 = vmatpush.msra.mxu0 0.0
    %744 = vmatpush.msra.mxu0 0.0
    %745 = vmatpush.msra.mxu0 0.0
    %746 = vmatpush.msra.mxu0 0.0
    %747 = vmatpush.msra.mxu0 0.0
    %748 = vmatpush.msra.mxu0 %v691
    %749 = vmatmul.f32.gmra.mxu0 %v685
    %v750 = vpop.f32.mrf.mxu0
    %v751 = vadd.f32 0.0, %v750
    %752 = vdwg.mxu0
    %v753 = vadd.f32 %v660, %v711
    %v754 = vadd.f32 %v661, %v731
    %v755 = vadd.f32 %v662, %v751
    %s756 = scalar_lea.vmem %s1, 64
    %v757 = vld [vmem:[%s756] sm:$0xff]
    %v758 = vld [vmem:[%s0] sm:$0xff]
    %v759 = vld [vmem:[%s0 + $0x8] sm:$0xf]
    %762 = vst [vmem:[#allocation1] ss:$2 sm:$0xff] %v758
    %s763 = scalar_lea.vmem [#allocation1], 16
    %764 = vst [vmem:[%s763] ss:$2 sm:$0xff] %v759
    %v765 = vld.sshfl [vmem:[#allocation1] sm:$0xff pattern:$0x75316420]
    %v766 = vld.sshfl [vmem:[#allocation1 + $0x8] sm:$0xff pattern:$0x75316420]
    %v767 = vld.sshfl [vmem:[#allocation1 + $0x10] sm:$0xff pattern:$0x75316420]
    %768 = vrot.lane.b32.xlu0 %v765, 90
    %v769 = vpop.permute.xlu0 %768
    %770 = vrot.lane.b32.xlu0 %v766, 90
    %v771 = vpop.permute.xlu0 %770
    %772 = vrot.lane.b32.xlu0 %v767, 90
    %v773 = vpop.permute.xlu0 %772
    %vm774 = vcmask 736256
    %v775 = vsel %vm774, %v769, %v771
    %v776 = vsel %vm774, %v771, %v773
    %v778 = vsel %vm52, %v757, 0
    %v780 = vsel %vm56, %v775, 0
    %v782 = vsel %vm56, %v776, 0
    %v784 = vsel %vm56, %v773, 0
    %786 = vmatpush.msra.mxu0 0.0
    %787 = vmatpush.msra.mxu0 0.0
    %788 = vmatpush.msra.mxu0 0.0
    %789 = vmatpush.msra.mxu0 0.0
    %790 = vmatpush.msra.mxu0 0.0
    %791 = vmatpush.msra.mxu0 0.0
    %792 = vmatpush.msra.mxu0 0.0
    %793 = vmatpush.msra.mxu0 0.0
    %794 = vmatpush.msra.mxu0 0.0
    %795 = vmatpush.msra.mxu0 0.0
    %796 = vmatpush.msra.mxu0 0.0
    %797 = vmatpush.msra.mxu0 0.0
    %798 = vmatpush.msra.mxu0 0.0
    %799 = vmatpush.msra.mxu0 0.0
    %800 = vmatpush.msra.mxu0 0.0
    %801 = vmatpush.msra.mxu0 %v780
    %802 = vmatmul.f32.gmra.mxu0 %v778
    %v803 = vpop.f32.mrf.mxu0
    %v804 = vadd.f32 0.0, %v803
    %805 = vdwg.mxu0
    %806 = vmatpush.msra.mxu0 0.0
    %807 = vmatpush.msra.mxu0 0.0
    %808 = vmatpush.msra.mxu0 0.0
    %809 = vmatpush.msra.mxu0 0.0
    %810 = vmatpush.msra.mxu0 0.0
    %811 = vmatpush.msra.mxu0 0.0
    %812 = vmatpush.msra.mxu0 0.0
    %813 = vmatpush.msra.mxu0 0.0
    %814 = vmatpush.msra.mxu0 0.0
    %815 = vmatpush.msra.mxu0 0.0
    %816 = vmatpush.msra.mxu0 0.0
    %817 = vmatpush.msra.mxu0 0.0
    %818 = vmatpush.msra.mxu0 0.0
    %819 = vmatpush.msra.mxu0 0.0
    %820 = vmatpush.msra.mxu0 0.0
    %821 = vmatpush.msra.mxu0 %v782
    %822 = vmatmul.f32.gmra.mxu0 %v778
    %v823 = vpop.f32.mrf.mxu0
    %v824 = vadd.f32 0.0, %v823
    %825 = vdwg.mxu0
    %826 = vmatpush.msra.mxu0 0.0
    %827 = vmatpush.msra.mxu0 0.0
    %828 = vmatpush.msra.mxu0 0.0
    %829 = vmatpush.msra.mxu0 0.0
    %830 = vmatpush.msra.mxu0 0.0
    %831 = vmatpush.msra.mxu0 0.0
    %832 = vmatpush.msra.mxu0 0.0
    %833 = vmatpush.msra.mxu0 0.0
    %834 = vmatpush.msra.mxu0 0.0
    %835 = vmatpush.msra.mxu0 0.0
    %836 = vmatpush.msra.mxu0 0.0
    %837 = vmatpush.msra.mxu0 0.0
    %838 = vmatpush.msra.mxu0 0.0
    %839 = vmatpush.msra.mxu0 0.0
    %840 = vmatpush.msra.mxu0 0.0
    %841 = vmatpush.msra.mxu0 %v784
    %842 = vmatmul.f32.gmra.mxu0 %v778
    %v843 = vpop.f32.mrf.mxu0
    %v844 = vadd.f32 0.0, %v843
    %845 = vdwg.mxu0
    %v846 = vadd.f32 %v753, %v804
    %v847 = vadd.f32 %v754, %v824
    %v848 = vadd.f32 %v755, %v844
    %850 = vset.pattern.permute.xlu0 0
    %851 = vperm.xlu0 %850, %v29
    %v852 = vpop.permute.xlu0 %851
    %v854 = vadd.f32 %v846, %v852
    %v855 = vadd.f32 %v847, %v852
    %v856 = vadd.f32 %v848, %v852
    %v857 = vmax.f32 %v854, 0.0
    %v858 = vmax.f32 %v855, 0.0
    %v859 = vmax.f32 %v856, 0.0
    %v863 = vrot.slane %v858, 7
    %v864 = vrot.slane %v859, 6
    %vm865 = vcmask 1040384
    %v866 = vsel %vm865, %v857, %v863
    %vm867 = vcmask 1041408
    %v868 = vsel %vm867, %v866, %v864
    %v870 = vlaneseq
    %vm871 = vcmp.ge.s32.totalorder %v870, 0
    %vm872 = vcmp.lt.s32.totalorder %v870, 286
    %vm873 = vmand %vm871, %vm872
    %874 = vst.msk [vmem:[%s6] ss:$2 sm:$0x7] %vm873, %v868
    %875 = vst [vmem:[#allocation1] sm:$0xff] %v857
    %876 = vst [vmem:[#allocation1 + $0x9] sm:$0xff] %v858
    %877 = vst [vmem:[#allocation1 + $0x12] sm:$0xff] %v859
    %s878 = scalar_lea.vmem [#allocation1], 1
    %v879 = vld [vmem:[%s878] ss:$9 sm:$0xff]
    %s881 = scalar_lea.vmem %s6, 6
    %882 = vst.msk [vmem:[%s881] ss:$2 sm:$0x7] %vm873, %v879
    %883 = vst [vmem:[#allocation1] sm:$0xff] %v857
    %884 = vst [vmem:[#allocation1 + $0x9] sm:$0xff] %v858
    %885 = vst [vmem:[#allocation1 + $0x12] sm:$0xff] %v859
    %s886 = scalar_lea.vmem [#allocation1], 2
    %v887 = vld [vmem:[%s886] ss:$9 sm:$0xff]
    %s889 = scalar_lea.vmem %s6, 12
    %890 = vst.msk [vmem:[%s889] ss:$2 sm:$0x7] %vm873, %v887
    %891 = vst [vmem:[#allocation1] sm:$0xff] %v857
    %892 = vst [vmem:[#allocation1 + $0x9] sm:$0xff] %v858
    %893 = vst [vmem:[#allocation1 + $0x12] sm:$0xff] %v859
    %s894 = scalar_lea.vmem [#allocation1], 3
    %v895 = vld [vmem:[%s894] ss:$9 sm:$0xff]
    %s897 = scalar_lea.vmem %s6, 18
    %898 = vst.msk [vmem:[%s897] ss:$2 sm:$0x7] %vm873, %v895
    %899 = vst [vmem:[#allocation1] sm:$0xff] %v857
    %900 = vst [vmem:[#allocation1 + $0x9] sm:$0xff] %v858
    %901 = vst [vmem:[#allocation1 + $0x12] sm:$0xff] %v859
    %s902 = scalar_lea.vmem [#allocation1], 4
    %v903 = vld [vmem:[%s902] ss:$9 sm:$0xff]
    %s905 = scalar_lea.vmem %s6, 24
    %906 = vst.msk [vmem:[%s905] ss:$2 sm:$0x7] %vm873, %v903
    %907 = vst [vmem:[#allocation1] sm:$0xff] %v857
    %908 = vst [vmem:[#allocation1 + $0x9] sm:$0xff] %v858
    %909 = vst [vmem:[#allocation1 + $0x12] sm:$0xff] %v859
    %s910 = scalar_lea.vmem [#allocation1], 5
    %v911 = vld [vmem:[%s910] ss:$9 sm:$0xff]
    %s913 = scalar_lea.vmem %s6, 30
    %914 = vst.msk [vmem:[%s913] ss:$2 sm:$0x7] %vm873, %v911
    %915 = vst [vmem:[#allocation1] sm:$0xff] %v857
    %916 = vst [vmem:[#allocation1 + $0x9] sm:$0xff] %v858
    %917 = vst [vmem:[#allocation1 + $0x12] sm:$0xff] %v859
    %s918 = scalar_lea.vmem [#allocation1], 6
    %v919 = vld [vmem:[%s918] ss:$9 sm:$0xff]
    %s921 = scalar_lea.vmem %s6, 36
    %922 = vst.msk [vmem:[%s921] ss:$2 sm:$0x7] %vm873, %v919
    %923 = vst [vmem:[#allocation1] sm:$0xff] %v857
    %924 = vst [vmem:[#allocation1 + $0x9] sm:$0xff] %v858
    %925 = vst [vmem:[#allocation1 + $0x12] sm:$0xff] %v859
    %s926 = scalar_lea.vmem [#allocation1], 7
    %v927 = vld [vmem:[%s926] ss:$9 sm:$0xff]
    %s929 = scalar_lea.vmem %s6, 42
    %930 = vst.msk [vmem:[%s929] ss:$2 sm:$0x7] %vm873, %v927
    %v931 = vld [vmem:[%s1] sm:$0xff]
    %v932 = vld [vmem:[%s0 + $0x8] sm:$0xff]
    %v933 = vld [vmem:[%s0 + $0x10] sm:$0xf]
    %v934 = vld [vmem:[%s33] sm:$0xff]
    %937 = vst [vmem:[#allocation1] ss:$2 sm:$0xff] %v932
    %s938 = scalar_lea.vmem [#allocation1], 16
    %939 = vst [vmem:[%s938] ss:$2 sm:$0xff] %v933
    %v940 = vld.sshfl [vmem:[#allocation1] sm:$0xff pattern:$0x75316420]
    %v941 = vld.sshfl [vmem:[#allocation1 + $0x8] sm:$0xff pattern:$0x75316420]
    %v942 = vld.sshfl [vmem:[#allocation1 + $0x10] sm:$0xff pattern:$0x75316420]
    %943 = vrot.lane.b32.xlu0 %v940, 59
    %v944 = vpop.permute.xlu0 %943
    %945 = vrot.lane.b32.xlu0 %v941, 59
    %v946 = vpop.permute.xlu0 %945
    %947 = vrot.lane.b32.xlu0 %v942, 59
    %v948 = vpop.permute.xlu0 %947
    %vm949 = vcmask 482304
    %v950 = vsel %vm949, %v944, %v946
    %v951 = vsel %vm949, %v946, %v948
    %v953 = vsel %vm52, %v934, 0
    %v955 = vsel %vm56, %v950, 0
    %v957 = vsel %vm56, %v951, 0
    %v959 = vsel %vm56, %v948, 0
    %961 = vmatpush.msra.mxu0 0.0
    %962 = vmatpush.msra.mxu0 0.0
    %963 = vmatpush.msra.mxu0 0.0
    %964 = vmatpush.msra.mxu0 0.0
    %965 = vmatpush.msra.mxu0 0.0
    %966 = vmatpush.msra.mxu0 0.0
    %967 = vmatpush.msra.mxu0 0.0
    %968 = vmatpush.msra.mxu0 0.0
    %969 = vmatpush.msra.mxu0 0.0
    %970 = vmatpush.msra.mxu0 0.0
    %971 = vmatpush.msra.mxu0 0.0
    %972 = vmatpush.msra.mxu0 0.0
    %973 = vmatpush.msra.mxu0 0.0
    %974 = vmatpush.msra.mxu0 0.0
    %975 = vmatpush.msra.mxu0 0.0
    %976 = vmatpush.msra.mxu0 %v955
    %977 = vmatmul.f32.gmra.mxu0 %v953
    %v978 = vpop.f32.mrf.mxu0
    %v979 = vadd.f32 0.0, %v978
    %980 = vdwg.mxu0
    %981 = vmatpush.msra.mxu0 0.0
    %982 = vmatpush.msra.mxu0 0.0
    %983 = vmatpush.msra.mxu0 0.0
    %984 = vmatpush.msra.mxu0 0.0
    %985 = vmatpush.msra.mxu0 0.0
    %986 = vmatpush.msra.mxu0 0.0
    %987 = vmatpush.msra.mxu0 0.0
    %988 = vmatpush.msra.mxu0 0.0
    %989 = vmatpush.msra.mxu0 0.0
    %990 = vmatpush.msra.mxu0 0.0
    %991 = vmatpush.msra.mxu0 0.0
    %992 = vmatpush.msra.mxu0 0.0
    %993 = vmatpush.msra.mxu0 0.0
    %994 = vmatpush.msra.mxu0 0.0
    %995 = vmatpush.msra.mxu0 0.0
    %996 = vmatpush.msra.mxu0 %v957
    %997 = vmatmul.f32.gmra.mxu0 %v953
    %v998 = vpop.f32.mrf.mxu0
    %v999 = vadd.f32 0.0, %v998
    %1000 = vdwg.mxu0
    %1001 = vmatpush.msra.mxu0 0.0
    %1002 = vmatpush.msra.mxu0 0.0
    %1003 = vmatpush.msra.mxu0 0.0
    %1004 = vmatpush.msra.mxu0 0.0
    %1005 = vmatpush.msra.mxu0 0.0
    %1006 = vmatpush.msra.mxu0 0.0
    %1007 = vmatpush.msra.mxu0 0.0
    %1008 = vmatpush.msra.mxu0 0.0
    %1009 = vmatpush.msra.mxu0 0.0
    %1010 = vmatpush.msra.mxu0 0.0
    %1011 = vmatpush.msra.mxu0 0.0
    %1012 = vmatpush.msra.mxu0 0.0
    %1013 = vmatpush.msra.mxu0 0.0
    %1014 = vmatpush.msra.mxu0 0.0
    %1015 = vmatpush.msra.mxu0 0.0
    %1016 = vmatpush.msra.mxu0 %v959
    %1017 = vmatmul.f32.gmra.mxu0 %v953
    %v1018 = vpop.f32.mrf.mxu0
    %v1019 = vadd.f32 0.0, %v1018
    %1020 = vdwg.mxu0
    %1021 = vst [vmem:[#allocation1] ss:$2 sm:$0xff] %v932
    %s1022 = scalar_lea.vmem [#allocation1], 16
    %1023 = vst [vmem:[%s1022] ss:$2 sm:$0xff] %v933
    %v1024 = vld.sshfl [vmem:[#allocation1] sm:$0xff pattern:$0x75316420]
    %v1025 = vld.sshfl [vmem:[#allocation1 + $0x8] sm:$0xff pattern:$0x75316420]
    %v1026 = vld.sshfl [vmem:[#allocation1 + $0x10] sm:$0xff pattern:$0x75316420]
    %1027 = vrot.lane.b32.xlu0 %v1024, 60
    %v1028 = vpop.permute.xlu0 %1027
    %1029 = vrot.lane.b32.xlu0 %v1025, 60
    %v1030 = vpop.permute.xlu0 %1029
    %1031 = vrot.lane.b32.xlu0 %v1026, 60
    %v1032 = vpop.permute.xlu0 %1031
    %vm1033 = vcmask 490496
    %v1034 = vsel %vm1033, %v1028, %v1030
    %v1035 = vsel %vm1033, %v1030, %v1032
    %v1037 = vsel %vm52, %v931, 0
    %v1039 = vsel %vm56, %v1034, 0
    %v1041 = vsel %vm56, %v1035, 0
    %v1043 = vsel %vm56, %v1032, 0
    %1045 = vmatpush.msra.mxu0 0.0
    %1046 = vmatpush.msra.mxu0 0.0
    %1047 = vmatpush.msra.mxu0 0.0
    %1048 = vmatpush.msra.mxu0 0.0
    %1049 = vmatpush.msra.mxu0 0.0
    %1050 = vmatpush.msra.mxu0 0.0
    %1051 = vmatpush.msra.mxu0 0.0
    %1052 = vmatpush.msra.mxu0 0.0
    %1053 = vmatpush.msra.mxu0 0.0
    %1054 = vmatpush.msra.mxu0 0.0
    %1055 = vmatpush.msra.mxu0 0.0
    %1056 = vmatpush.msra.mxu0 0.0
    %1057 = vmatpush.msra.mxu0 0.0
    %1058 = vmatpush.msra.mxu0 0.0
    %1059 = vmatpush.msra.mxu0 0.0
    %1060 = vmatpush.msra.mxu0 %v1039
    %1061 = vmatmul.f32.gmra.mxu0 %v1037
    %v1062 = vpop.f32.mrf.mxu0
    %v1063 = vadd.f32 %v979, %v1062
    %1064 = vdwg.mxu0
    %1065 = vmatpush.msra.mxu0 0.0
    %1066 = vmatpush.msra.mxu0 0.0
    %1067 = vmatpush.msra.mxu0 0.0
    %1068 = vmatpush.msra.mxu0 0.0
    %1069 = vmatpush.msra.mxu0 0.0
    %1070 = vmatpush.msra.mxu0 0.0
    %1071 = vmatpush.msra.mxu0 0.0
    %1072 = vmatpush.msra.mxu0 0.0
    %1073 = vmatpush.msra.mxu0 0.0
    %1074 = vmatpush.msra.mxu0 0.0
    %1075 = vmatpush.msra.mxu0 0.0
    %1076 = vmatpush.msra.mxu0 0.0
    %1077 = vmatpush.msra.mxu0 0.0
    %1078 = vmatpush.msra.mxu0 0.0
    %1079 = vmatpush.msra.mxu0 0.0
    %1080 = vmatpush.msra.mxu0 %v1041
    %1081 = vmatmul.f32.gmra.mxu0 %v1037
    %v1082 = vpop.f32.mrf.mxu0
    %v1083 = vadd.f32 %v999, %v1082
    %1084 = vdwg.mxu0
    %1085 = vmatpush.msra.mxu0 0.0
    %1086 = vmatpush.msra.mxu0 0.0
    %1087 = vmatpush.msra.mxu0 0.0
    %1088 = vmatpush.msra.mxu0 0.0
    %1089 = vmatpush.msra.mxu0 0.0
    %1090 = vmatpush.msra.mxu0 0.0
    %1091 = vmatpush.msra.mxu0 0.0
    %1092 = vmatpush.msra.mxu0 0.0
    %1093 = vmatpush.msra.mxu0 0.0
    %1094 = vmatpush.msra.mxu0 0.0
    %1095 = vmatpush.msra.mxu0 0.0
    %1096 = vmatpush.msra.mxu0 0.0
    %1097 = vmatpush.msra.mxu0 0.0
    %1098 = vmatpush.msra.mxu0 0.0
    %1099 = vmatpush.msra.mxu0 0.0
    %1100 = vmatpush.msra.mxu0 %v1043
    %1101 = vmatmul.f32.gmra.mxu0 %v1037
    %v1102 = vpop.f32.mrf.mxu0
    %v1103 = vadd.f32 %v1019, %v1102
    %1104 = vdwg.mxu0
    %v1105 = vld [vmem:[%s198] sm:$0xff]
    %v1106 = vld [vmem:[%s0 + $0x8] sm:$0xff]
    %v1107 = vld [vmem:[%s0 + $0x10] sm:$0xf]
    %1110 = vst [vmem:[#allocation1] ss:$2 sm:$0xff] %v1106
    %s1111 = scalar_lea.vmem [#allocation1], 16
    %1112 = vst [vmem:[%s1111] ss:$2 sm:$0xff] %v1107
    %v1113 = vld.sshfl [vmem:[#allocation1] sm:$0xff pattern:$0x75316420]
    %v1114 = vld.sshfl [vmem:[#allocation1 + $0x8] sm:$0xff pattern:$0x75316420]
    %v1115 = vld.sshfl [vmem:[#allocation1 + $0x10] sm:$0xff pattern:$0x75316420]
    %1116 = vrot.lane.b32.xlu0 %v1113, 58
    %v1117 = vpop.permute.xlu0 %1116
    %1118 = vrot.lane.b32.xlu0 %v1114, 58
    %v1119 = vpop.permute.xlu0 %1118
    %1120 = vrot.lane.b32.xlu0 %v1115, 58
    %v1121 = vpop.permute.xlu0 %1120
    %vm1122 = vcmask 474112
    %v1123 = vsel %vm1122, %v1117, %v1119
    %v1124 = vsel %vm1122, %v1119, %v1121
    %v1126 = vsel %vm52, %v1105, 0
    %v1128 = vsel %vm56, %v1123, 0
    %v1130 = vsel %vm56, %v1124, 0
    %v1132 = vsel %vm56, %v1121, 0
    %1134 = vmatpush.msra.mxu0 0.0
    %1135 = vmatpush.msra.mxu0 0.0
    %1136 = vmatpush.msra.mxu0 0.0
    %1137 = vmatpush.msra.mxu0 0.0
    %1138 = vmatpush.msra.mxu0 0.0
    %1139 = vmatpush.msra.mxu0 0.0
    %1140 = vmatpush.msra.mxu0 0.0
    %1141 = vmatpush.msra.mxu0 0.0
    %1142 = vmatpush.msra.mxu0 0.0
    %1143 = vmatpush.msra.mxu0 0.0
    %1144 = vmatpush.msra.mxu0 0.0
    %1145 = vmatpush.msra.mxu0 0.0
    %1146 = vmatpush.msra.mxu0 0.0
    %1147 = vmatpush.msra.mxu0 0.0
    %1148 = vmatpush.msra.mxu0 0.0
    %1149 = vmatpush.msra.mxu0 %v1128
    %1150 = vmatmul.f32.gmra.mxu0 %v1126
    %v1151 = vpop.f32.mrf.mxu0
    %v1152 = vadd.f32 0.0, %v1151
    %1153 = vdwg.mxu0
    %1154 = vmatpush.msra.mxu0 0.0
    %1155 = vmatpush.msra.mxu0 0.0
    %1156 = vmatpush.msra.mxu0 0.0
    %1157 = vmatpush.msra.mxu0 0.0
    %1158 = vmatpush.msra.mxu0 0.0
    %1159 = vmatpush.msra.mxu0 0.0
    %1160 = vmatpush.msra.mxu0 0.0
    %1161 = vmatpush.msra.mxu0 0.0
    %1162 = vmatpush.msra.mxu0 0.0
    %1163 = vmatpush.msra.mxu0 0.0
    %1164 = vmatpush.msra.mxu0 0.0
    %1165 = vmatpush.msra.mxu0 0.0
    %1166 = vmatpush.msra.mxu0 0.0
    %1167 = vmatpush.msra.mxu0 0.0
    %1168 = vmatpush.msra.mxu0 0.0
    %1169 = vmatpush.msra.mxu0 %v1130
    %1170 = vmatmul.f32.gmra.mxu0 %v1126
    %v1171 = vpop.f32.mrf.mxu0
    %v1172 = vadd.f32 0.0, %v1171
    %1173 = vdwg.mxu0
    %1174 = vmatpush.msra.mxu0 0.0
    %1175 = vmatpush.msra.mxu0 0.0
    %1176 = vmatpush.msra.mxu0 0.0
    %1177 = vmatpush.msra.mxu0 0.0
    %1178 = vmatpush.msra.mxu0 0.0
    %1179 = vmatpush.msra.mxu0 0.0
    %1180 = vmatpush.msra.mxu0 0.0
    %1181 = vmatpush.msra.mxu0 0.0
    %1182 = vmatpush.msra.mxu0 0.0
    %1183 = vmatpush.msra.mxu0 0.0
    %1184 = vmatpush.msra.mxu0 0.0
    %1185 = vmatpush.msra.mxu0 0.0
    %1186 = vmatpush.msra.mxu0 0.0
    %1187 = vmatpush.msra.mxu0 0.0
    %1188 = vmatpush.msra.mxu0 0.0
    %1189 = vmatpush.msra.mxu0 %v1132
    %1190 = vmatmul.f32.gmra.mxu0 %v1126
    %v1191 = vpop.f32.mrf.mxu0
    %v1192 = vadd.f32 0.0, %v1191
    %1193 = vdwg.mxu0
    %v1194 = vadd.f32 %v1063, %v1152
    %v1195 = vadd.f32 %v1083, %v1172
    %v1196 = vadd.f32 %v1103, %v1192
    %v1197 = vld [vmem:[%s291] sm:$0xff]
    %v1198 = vld [vmem:[%s0 + $0x8] sm:$0xff]
    %v1199 = vld [vmem:[%s0 + $0x10] sm:$0xf]
    %1202 = vst [vmem:[#allocation1] ss:$2 sm:$0xff] %v1198
    %s1203 = scalar_lea.vmem [#allocation1], 16
    %1204 = vst [vmem:[%s1203] ss:$2 sm:$0xff] %v1199
    %v1205 = vld.sshfl [vmem:[#allocation1] sm:$0xff pattern:$0x75316420]
    %v1206 = vld.sshfl [vmem:[#allocation1 + $0x8] sm:$0xff pattern:$0x75316420]
    %v1207 = vld.sshfl [vmem:[#allocation1 + $0x10] sm:$0xff pattern:$0x75316420]
    %1208 = vrot.lane.b32.xlu0 %v1205, 42
    %v1209 = vpop.permute.xlu0 %1208
    %1210 = vrot.lane.b32.xlu0 %v1206, 42
    %v1211 = vpop.permute.xlu0 %1210
    %1212 = vrot.lane.b32.xlu0 %v1207, 42
    %v1213 = vpop.permute.xlu0 %1212
    %vm1214 = vcmask 343040
    %v1215 = vsel %vm1214, %v1209, %v1211
    %v1216 = vsel %vm1214, %v1211, %v1213
    %v1218 = vsel %vm52, %v1197, 0
    %v1220 = vsel %vm56, %v1215, 0
    %v1222 = vsel %vm56, %v1216, 0
    %v1224 = vsel %vm56, %v1213, 0
    %1226 = vmatpush.msra.mxu0 0.0
    %1227 = vmatpush.msra.mxu0 0.0
    %1228 = vmatpush.msra.mxu0 0.0
    %1229 = vmatpush.msra.mxu0 0.0
    %1230 = vmatpush.msra.mxu0 0.0
    %1231 = vmatpush.msra.mxu0 0.0
    %1232 = vmatpush.msra.mxu0 0.0
    %1233 = vmatpush.msra.mxu0 0.0
    %1234 = vmatpush.msra.mxu0 0.0
    %1235 = vmatpush.msra.mxu0 0.0
    %1236 = vmatpush.msra.mxu0 0.0
    %1237 = vmatpush.msra.mxu0 0.0
    %1238 = vmatpush.msra.mxu0 0.0
    %1239 = vmatpush.msra.mxu0 0.0
    %1240 = vmatpush.msra.mxu0 0.0
    %1241 = vmatpush.msra.mxu0 %v1220
    %1242 = vmatmul.f32.gmra.mxu0 %v1218
    %v1243 = vpop.f32.mrf.mxu0
    %v1244 = vadd.f32 0.0, %v1243
    %1245 = vdwg.mxu0
    %1246 = vmatpush.msra.mxu0 0.0
    %1247 = vmatpush.msra.mxu0 0.0
    %1248 = vmatpush.msra.mxu0 0.0
    %1249 = vmatpush.msra.mxu0 0.0
    %1250 = vmatpush.msra.mxu0 0.0
    %1251 = vmatpush.msra.mxu0 0.0
    %1252 = vmatpush.msra.mxu0 0.0
    %1253 = vmatpush.msra.mxu0 0.0
    %1254 = vmatpush.msra.mxu0 0.0
    %1255 = vmatpush.msra.mxu0 0.0
    %1256 = vmatpush.msra.mxu0 0.0
    %1257 = vmatpush.msra.mxu0 0.0
    %1258 = vmatpush.msra.mxu0 0.0
    %1259 = vmatpush.msra.mxu0 0.0
    %1260 = vmatpush.msra.mxu0 0.0
    %1261 = vmatpush.msra.mxu0 %v1222
    %1262 = vmatmul.f32.gmra.mxu0 %v1218
    %v1263 = vpop.f32.mrf.mxu0
    %v1264 = vadd.f32 0.0, %v1263
    %1265 = vdwg.mxu0
    %1266 = vmatpush.msra.mxu0 0.0
    %1267 = vmatpush.msra.mxu0 0.0
    %1268 = vmatpush.msra.mxu0 0.0
    %1269 = vmatpush.msra.mxu0 0.0
    %1270 = vmatpush.msra.mxu0 0.0
    %1271 = vmatpush.msra.mxu0 0.0
    %1272 = vmatpush.msra.mxu0 0.0
    %1273 = vmatpush.msra.mxu0 0.0
    %1274 = vmatpush.msra.mxu0 0.0
    %1275 = vmatpush.msra.mxu0 0.0
    %1276 = vmatpush.msra.mxu0 0.0
    %1277 = vmatpush.msra.mxu0 0.0
    %1278 = vmatpush.msra.mxu0 0.0
    %1279 = vmatpush.msra.mxu0 0.0
    %1280 = vmatpush.msra.mxu0 0.0
    %1281 = vmatpush.msra.mxu0 %v1224
    %1282 = vmatmul.f32.gmra.mxu0 %v1218
    %v1283 = vpop.f32.mrf.mxu0
    %v1284 = vadd.f32 0.0, %v1283
    %1285 = vdwg.mxu0
    %v1286 = vadd.f32 %v1194, %v1244
    %v1287 = vadd.f32 %v1195, %v1264
    %v1288 = vadd.f32 %v1196, %v1284
    %v1289 = vld [vmem:[%s384] sm:$0xff]
    %v1290 = vld [vmem:[%s0 + $0x8] sm:$0xff]
    %v1291 = vld [vmem:[%s0 + $0x10] sm:$0xf]
    %1294 = vst [vmem:[#allocation1] ss:$2 sm:$0xff] %v1290
    %s1295 = scalar_lea.vmem [#allocation1], 16
    %1296 = vst [vmem:[%s1295] ss:$2 sm:$0xff] %v1291
    %v1297 = vld.sshfl [vmem:[#allocation1] sm:$0xff pattern:$0x75316420]
    %v1298 = vld.sshfl [vmem:[#allocation1 + $0x8] sm:$0xff pattern:$0x75316420]
    %v1299 = vld.sshfl [vmem:[#allocation1 + $0x10] sm:$0xff pattern:$0x75316420]
    %1300 = vrot.lane.b32.xlu0 %v1297, 41
    %v1301 = vpop.permute.xlu0 %1300
    %1302 = vrot.lane.b32.xlu0 %v1298, 41
    %v1303 = vpop.permute.xlu0 %1302
    %1304 = vrot.lane.b32.xlu0 %v1299, 41
    %v1305 = vpop.permute.xlu0 %1304
    %vm1306 = vcmask 334848
    %v1307 = vsel %vm1306, %v1301, %v1303
    %v1308 = vsel %vm1306, %v1303, %v1305
    %v1310 = vsel %vm52, %v1289, 0
    %v1312 = vsel %vm56, %v1307, 0
    %v1314 = vsel %vm56, %v1308, 0
    %v1316 = vsel %vm56, %v1305, 0
    %1318 = vmatpush.msra.mxu0 0.0
    %1319 = vmatpush.msra.mxu0 0.0
    %1320 = vmatpush.msra.mxu0 0.0
    %1321 = vmatpush.msra.mxu0 0.0
    %1322 = vmatpush.msra.mxu0 0.0
    %1323 = vmatpush.msra.mxu0 0.0
    %1324 = vmatpush.msra.mxu0 0.0
    %1325 = vmatpush.msra.mxu0 0.0
    %1326 = vmatpush.msra.mxu0 0.0
    %1327 = vmatpush.msra.mxu0 0.0
    %1328 = vmatpush.msra.mxu0 0.0
    %1329 = vmatpush.msra.mxu0 0.0
    %1330 = vmatpush.msra.mxu0 0.0
    %1331 = vmatpush.msra.mxu0 0.0
    %1332 = vmatpush.msra.mxu0 0.0
    %1333 = vmatpush.msra.mxu0 %v1312
    %1334 = vmatmul.f32.gmra.mxu0 %v1310
    %v1335 = vpop.f32.mrf.mxu0
    %v1336 = vadd.f32 0.0, %v1335
    %1337 = vdwg.mxu0
    %1338 = vmatpush.msra.mxu0 0.0
    %1339 = vmatpush.msra.mxu0 0.0
    %1340 = vmatpush.msra.mxu0 0.0
    %1341 = vmatpush.msra.mxu0 0.0
    %1342 = vmatpush.msra.mxu0 0.0
    %1343 = vmatpush.msra.mxu0 0.0
    %1344 = vmatpush.msra.mxu0 0.0
    %1345 = vmatpush.msra.mxu0 0.0
    %1346 = vmatpush.msra.mxu0 0.0
    %1347 = vmatpush.msra.mxu0 0.0
    %1348 = vmatpush.msra.mxu0 0.0
    %1349 = vmatpush.msra.mxu0 0.0
    %1350 = vmatpush.msra.mxu0 0.0
    %1351 = vmatpush.msra.mxu0 0.0
    %1352 = vmatpush.msra.mxu0 0.0
    %1353 = vmatpush.msra.mxu0 %v1314
    %1354 = vmatmul.f32.gmra.mxu0 %v1310
    %v1355 = vpop.f32.mrf.mxu0
    %v1356 = vadd.f32 0.0, %v1355
    %1357 = vdwg.mxu0
    %1358 = vmatpush.msra.mxu0 0.0
    %1359 = vmatpush.msra.mxu0 0.0
    %1360 = vmatpush.msra.mxu0 0.0
    %1361 = vmatpush.msra.mxu0 0.0
    %1362 = vmatpush.msra.mxu0 0.0
    %1363 = vmatpush.msra.mxu0 0.0
    %1364 = vmatpush.msra.mxu0 0.0
    %1365 = vmatpush.msra.mxu0 0.0
    %1366 = vmatpush.msra.mxu0 0.0
    %1367 = vmatpush.msra.mxu0 0.0
    %1368 = vmatpush.msra.mxu0 0.0
    %1369 = vmatpush.msra.mxu0 0.0
    %1370 = vmatpush.msra.mxu0 0.0
    %1371 = vmatpush.msra.mxu0 0.0
    %1372 = vmatpush.msra.mxu0 0.0
    %1373 = vmatpush.msra.mxu0 %v1316
    %1374 = vmatmul.f32.gmra.mxu0 %v1310
    %v1375 = vpop.f32.mrf.mxu0
    %v1376 = vadd.f32 0.0, %v1375
    %1377 = vdwg.mxu0
    %v1378 = vadd.f32 %v1286, %v1336
    %v1379 = vadd.f32 %v1287, %v1356
    %v1380 = vadd.f32 %v1288, %v1376
    %v1381 = vld [vmem:[%s477] sm:$0xff]
    %v1382 = vld [vmem:[%s0 + $0x8] sm:$0xff]
    %v1383 = vld [vmem:[%s0 + $0x10] sm:$0xf]
    %1386 = vst [vmem:[#allocation1] ss:$2 sm:$0xff] %v1382
    %s1387 = scalar_lea.vmem [#allocation1], 16
    %1388 = vst [vmem:[%s1387] ss:$2 sm:$0xff] %v1383
    %v1389 = vld.sshfl [vmem:[#allocation1] sm:$0xff pattern:$0x75316420]
    %v1390 = vld.sshfl [vmem:[#allocation1 + $0x8] sm:$0xff pattern:$0x75316420]
    %v1391 = vld.sshfl [vmem:[#allocation1 + $0x10] sm:$0xff pattern:$0x75316420]
    %1392 = vrot.lane.b32.xlu0 %v1389, 40
    %v1393 = vpop.permute.xlu0 %1392
    %1394 = vrot.lane.b32.xlu0 %v1390, 40
    %v1395 = vpop.permute.xlu0 %1394
    %1396 = vrot.lane.b32.xlu0 %v1391, 40
    %v1397 = vpop.permute.xlu0 %1396
    %vm1398 = vcmask 326656
    %v1399 = vsel %vm1398, %v1393, %v1395
    %v1400 = vsel %vm1398, %v1395, %v1397
    %v1402 = vsel %vm52, %v1381, 0
    %v1404 = vsel %vm56, %v1399, 0
    %v1406 = vsel %vm56, %v1400, 0
    %v1408 = vsel %vm56, %v1397, 0
    %1410 = vmatpush.msra.mxu0 0.0
    %1411 = vmatpush.msra.mxu0 0.0
    %1412 = vmatpush.msra.mxu0 0.0
    %1413 = vmatpush.msra.mxu0 0.0
    %1414 = vmatpush.msra.mxu0 0.0
    %1415 = vmatpush.msra.mxu0 0.0
    %1416 = vmatpush.msra.mxu0 0.0
    %1417 = vmatpush.msra.mxu0 0.0
    %1418 = vmatpush.msra.mxu0 0.0
    %1419 = vmatpush.msra.mxu0 0.0
    %1420 = vmatpush.msra.mxu0 0.0
    %1421 = vmatpush.msra.mxu0 0.0
    %1422 = vmatpush.msra.mxu0 0.0
    %1423 = vmatpush.msra.mxu0 0.0
    %1424 = vmatpush.msra.mxu0 0.0
    %1425 = vmatpush.msra.mxu0 %v1404
    %1426 = vmatmul.f32.gmra.mxu0 %v1402
    %v1427 = vpop.f32.mrf.mxu0
    %v1428 = vadd.f32 0.0, %v1427
    %1429 = vdwg.mxu0
    %1430 = vmatpush.msra.mxu0 0.0
    %1431 = vmatpush.msra.mxu0 0.0
    %1432 = vmatpush.msra.mxu0 0.0
    %1433 = vmatpush.msra.mxu0 0.0
    %1434 = vmatpush.msra.mxu0 0.0
    %1435 = vmatpush.msra.mxu0 0.0
    %1436 = vmatpush.msra.mxu0 0.0
    %1437 = vmatpush.msra.mxu0 0.0
    %1438 = vmatpush.msra.mxu0 0.0
    %1439 = vmatpush.msra.mxu0 0.0
    %1440 = vmatpush.msra.mxu0 0.0
    %1441 = vmatpush.msra.mxu0 0.0
    %1442 = vmatpush.msra.mxu0 0.0
    %1443 = vmatpush.msra.mxu0 0.0
    %1444 = vmatpush.msra.mxu0 0.0
    %1445 = vmatpush.msra.mxu0 %v1406
    %1446 = vmatmul.f32.gmra.mxu0 %v1402
    %v1447 = vpop.f32.mrf.mxu0
    %v1448 = vadd.f32 0.0, %v1447
    %1449 = vdwg.mxu0
    %1450 = vmatpush.msra.mxu0 0.0
    %1451 = vmatpush.msra.mxu0 0.0
    %1452 = vmatpush.msra.mxu0 0.0
    %1453 = vmatpush.msra.mxu0 0.0
    %1454 = vmatpush.msra.mxu0 0.0
    %1455 = vmatpush.msra.mxu0 0.0
    %1456 = vmatpush.msra.mxu0 0.0
    %1457 = vmatpush.msra.mxu0 0.0
    %1458 = vmatpush.msra.mxu0 0.0
    %1459 = vmatpush.msra.mxu0 0.0
    %1460 = vmatpush.msra.mxu0 0.0
    %1461 = vmatpush.msra.mxu0 0.0
    %1462 = vmatpush.msra.mxu0 0.0
    %1463 = vmatpush.msra.mxu0 0.0
    %1464 = vmatpush.msra.mxu0 0.0
    %1465 = vmatpush.msra.mxu0 %v1408
    %1466 = vmatmul.f32.gmra.mxu0 %v1402
    %v1467 = vpop.f32.mrf.mxu0
    %v1468 = vadd.f32 0.0, %v1467
    %1469 = vdwg.mxu0
    %v1470 = vadd.f32 %v1378, %v1428
    %v1471 = vadd.f32 %v1379, %v1448
    %v1472 = vadd.f32 %v1380, %v1468
    %v1473 = vld [vmem:[%s570] sm:$0xff]
    %v1474 = vld [vmem:[%s0 + $0x8] sm:$0xff]
    %v1475 = vld [vmem:[%s0 + $0x10] sm:$0xff]
    %1478 = vst [vmem:[#allocation1] ss:$2 sm:$0xff] %v1474
    %s1479 = scalar_lea.vmem [#allocation1], 16
    %1480 = vst [vmem:[%s1479] ss:$2 sm:$0xff] %v1475
    %v1481 = vld.sshfl [vmem:[#allocation1] sm:$0xff pattern:$0x75316420]
    %v1482 = vld.sshfl [vmem:[#allocation1 + $0x8] sm:$0xff pattern:$0x75316420]
    %v1483 = vld.sshfl [vmem:[#allocation1 + $0x10] sm:$0xff pattern:$0x75316420]
    %v1484 = vld.sshfl [vmem:[#allocation1 + $0x18] sm:$0xff pattern:$0x75316420]
    %1485 = vrot.lane.b32.xlu0 %v1481, 24
    %v1486 = vpop.permute.xlu0 %1485
    %1487 = vrot.lane.b32.xlu0 %v1482, 24
    %v1488 = vpop.permute.xlu0 %1487
    %1489 = vrot.lane.b32.xlu0 %v1483, 24
    %v1490 = vpop.permute.xlu0 %1489
    %1491 = vrot.lane.b32.xlu0 %v1484, 24
    %v1492 = vpop.permute.xlu0 %1491
    %vm1493 = vcmask 195584
    %v1494 = vsel %vm1493, %v1486, %v1488
    %v1495 = vsel %vm1493, %v1488, %v1490
    %v1496 = vsel %vm1493, %v1490, %v1492
    %v1498 = vsel %vm52, %v1473, 0
    %v1500 = vsel %vm56, %v1494, 0
    %v1502 = vsel %vm56, %v1495, 0
    %v1504 = vsel %vm56, %v1496, 0
    %1506 = vmatpush.msra.mxu0 0.0
    %1507 = vmatpush.msra.mxu0 0.0
    %1508 = vmatpush.msra.mxu0 0.0
    %1509 = vmatpush.msra.mxu0 0.0
    %1510 = vmatpush.msra.mxu0 0.0
    %1511 = vmatpush.msra.mxu0 0.0
    %1512 = vmatpush.msra.mxu0 0.0
    %1513 = vmatpush.msra.mxu0 0.0
    %1514 = vmatpush.msra.mxu0 0.0
    %1515 = vmatpush.msra.mxu0 0.0
    %1516 = vmatpush.msra.mxu0 0.0
    %1517 = vmatpush.msra.mxu0 0.0
    %1518 = vmatpush.msra.mxu0 0.0
    %1519 = vmatpush.msra.mxu0 0.0
    %1520 = vmatpush.msra.mxu0 0.0
    %1521 = vmatpush.msra.mxu0 %v1500
    %1522 = vmatmul.f32.gmra.mxu0 %v1498
    %v1523 = vpop.f32.mrf.mxu0
    %v1524 = vadd.f32 0.0, %v1523
    %1525 = vdwg.mxu0
    %1526 = vmatpush.msra.mxu0 0.0
    %1527 = vmatpush.msra.mxu0 0.0
    %1528 = vmatpush.msra.mxu0 0.0
    %1529 = vmatpush.msra.mxu0 0.0
    %1530 = vmatpush.msra.mxu0 0.0
    %1531 = vmatpush.msra.mxu0 0.0
    %1532 = vmatpush.msra.mxu0 0.0
    %1533 = vmatpush.msra.mxu0 0.0
    %1534 = vmatpush.msra.mxu0 0.0
    %1535 = vmatpush.msra.mxu0 0.0
    %1536 = vmatpush.msra.mxu0 0.0
    %1537 = vmatpush.msra.mxu0 0.0
    %1538 = vmatpush.msra.mxu0 0.0
    %1539 = vmatpush.msra.mxu0 0.0
    %1540 = vmatpush.msra.mxu0 0.0
    %1541 = vmatpush.msra.mxu0 %v1502
    %1542 = vmatmul.f32.gmra.mxu0 %v1498
    %v1543 = vpop.f32.mrf.mxu0
    %v1544 = vadd.f32 0.0, %v1543
    %1545 = vdwg.mxu0
    %1546 = vmatpush.msra.mxu0 0.0
    %1547 = vmatpush.msra.mxu0 0.0
    %1548 = vmatpush.msra.mxu0 0.0
    %1549 = vmatpush.msra.mxu0 0.0
    %1550 = vmatpush.msra.mxu0 0.0
    %1551 = vmatpush.msra.mxu0 0.0
    %1552 = vmatpush.msra.mxu0 0.0
    %1553 = vmatpush.msra.mxu0 0.0
    %1554 = vmatpush.msra.mxu0 0.0
    %1555 = vmatpush.msra.mxu0 0.0
    %1556 = vmatpush.msra.mxu0 0.0
    %1557 = vmatpush.msra.mxu0 0.0
    %1558 = vmatpush.msra.mxu0 0.0
    %1559 = vmatpush.msra.mxu0 0.0
    %1560 = vmatpush.msra.mxu0 0.0
    %1561 = vmatpush.msra.mxu0 %v1504
    %1562 = vmatmul.f32.gmra.mxu0 %v1498
    %v1563 = vpop.f32.mrf.mxu0
    %v1564 = vadd.f32 0.0, %v1563
    %1565 = vdwg.mxu0
    %v1566 = vadd.f32 %v1470, %v1524
    %v1567 = vadd.f32 %v1471, %v1544
    %v1568 = vadd.f32 %v1472, %v1564
    %v1569 = vld [vmem:[%s663] sm:$0xff]
    %v1570 = vld [vmem:[%s0 + $0x8] sm:$0xff]
    %v1571 = vld [vmem:[%s0 + $0x10] sm:$0xff]
    %1574 = vst [vmem:[#allocation1] ss:$2 sm:$0xff] %v1570
    %s1575 = scalar_lea.vmem [#allocation1], 16
    %1576 = vst [vmem:[%s1575] ss:$2 sm:$0xff] %v1571
    %v1577 = vld.sshfl [vmem:[#allocation1] sm:$0xff pattern:$0x75316420]
    %v1578 = vld.sshfl [vmem:[#allocation1 + $0x8] sm:$0xff pattern:$0x75316420]
    %v1579 = vld.sshfl [vmem:[#allocation1 + $0x10] sm:$0xff pattern:$0x75316420]
    %v1580 = vld.sshfl [vmem:[#allocation1 + $0x18] sm:$0xff pattern:$0x75316420]
    %1581 = vrot.lane.b32.xlu0 %v1577, 23
    %v1582 = vpop.permute.xlu0 %1581
    %1583 = vrot.lane.b32.xlu0 %v1578, 23
    %v1584 = vpop.permute.xlu0 %1583
    %1585 = vrot.lane.b32.xlu0 %v1579, 23
    %v1586 = vpop.permute.xlu0 %1585
    %1587 = vrot.lane.b32.xlu0 %v1580, 23
    %v1588 = vpop.permute.xlu0 %1587
    %vm1589 = vcmask 187392
    %v1590 = vsel %vm1589, %v1582, %v1584
    %v1591 = vsel %vm1589, %v1584, %v1586
    %v1592 = vsel %vm1589, %v1586, %v1588
    %v1594 = vsel %vm52, %v1569, 0
    %v1596 = vsel %vm56, %v1590, 0
    %v1598 = vsel %vm56, %v1591, 0
    %v1600 = vsel %vm56, %v1592, 0
    %1602 = vmatpush.msra.mxu0 0.0
    %1603 = vmatpush.msra.mxu0 0.0
    %1604 = vmatpush.msra.mxu0 0.0
    %1605 = vmatpush.msra.mxu0 0.0
    %1606 = vmatpush.msra.mxu0 0.0
    %1607 = vmatpush.msra.mxu0 0.0
    %1608 = vmatpush.msra.mxu0 0.0
    %1609 = vmatpush.msra.mxu0 0.0
    %1610 = vmatpush.msra.mxu0 0.0
    %1611 = vmatpush.msra.mxu0 0.0
    %1612 = vmatpush.msra.mxu0 0.0
    %1613 = vmatpush.msra.mxu0 0.0
    %1614 = vmatpush.msra.mxu0 0.0
    %1615 = vmatpush.msra.mxu0 0.0
    %1616 = vmatpush.msra.mxu0 0.0
    %1617 = vmatpush.msra.mxu0 %v1596
    %1618 = vmatmul.f32.gmra.mxu0 %v1594
    %v1619 = vpop.f32.mrf.mxu0
    %v1620 = vadd.f32 0.0, %v1619
    %1621 = vdwg.mxu0
    %1622 = vmatpush.msra.mxu0 0.0
    %1623 = vmatpush.msra.mxu0 0.0
    %1624 = vmatpush.msra.mxu0 0.0
    %1625 = vmatpush.msra.mxu0 0.0
    %1626 = vmatpush.msra.mxu0 0.0
    %1627 = vmatpush.msra.mxu0 0.0
    %1628 = vmatpush.msra.mxu0 0.0
    %1629 = vmatpush.msra.mxu0 0.0
    %1630 = vmatpush.msra.mxu0 0.0
    %1631 = vmatpush.msra.mxu0 0.0
    %1632 = vmatpush.msra.mxu0 0.0
    %1633 = vmatpush.msra.mxu0 0.0
    %1634 = vmatpush.msra.mxu0 0.0
    %1635 = vmatpush.msra.mxu0 0.0
    %1636 = vmatpush.msra.mxu0 0.0
    %1637 = vmatpush.msra.mxu0 %v1598
    %1638 = vmatmul.f32.gmra.mxu0 %v1594
    %v1639 = vpop.f32.mrf.mxu0
    %v1640 = vadd.f32 0.0, %v1639
    %1641 = vdwg.mxu0
    %1642 = vmatpush.msra.mxu0 0.0
    %1643 = vmatpush.msra.mxu0 0.0
    %1644 = vmatpush.msra.mxu0 0.0
    %1645 = vmatpush.msra.mxu0 0.0
    %1646 = vmatpush.msra.mxu0 0.0
    %1647 = vmatpush.msra.mxu0 0.0
    %1648 = vmatpush.msra.mxu0 0.0
    %1649 = vmatpush.msra.mxu0 0.0
    %1650 = vmatpush.msra.mxu0 0.0
    %1651 = vmatpush.msra.mxu0 0.0
    %1652 = vmatpush.msra.mxu0 0.0
    %1653 = vmatpush.msra.mxu0 0.0
    %1654 = vmatpush.msra.mxu0 0.0
    %1655 = vmatpush.msra.mxu0 0.0
    %1656 = vmatpush.msra.mxu0 0.0
    %1657 = vmatpush.msra.mxu0 %v1600
    %1658 = vmatmul.f32.gmra.mxu0 %v1594
    %v1659 = vpop.f32.mrf.mxu0
    %v1660 = vadd.f32 0.0, %v1659
    %1661 = vdwg.mxu0
    %v1662 = vadd.f32 %v1566, %v1620
    %v1663 = vadd.f32 %v1567, %v1640
    %v1664 = vadd.f32 %v1568, %v1660
    %v1665 = vld [vmem:[%s756] sm:$0xff]
    %v1666 = vld [vmem:[%s0 + $0x8] sm:$0xff]
    %v1667 = vld [vmem:[%s0 + $0x10] sm:$0xff]
    %1670 = vst [vmem:[#allocation1] ss:$2 sm:$0xff] %v1666
    %s1671 = scalar_lea.vmem [#allocation1], 16
    %1672 = vst [vmem:[%s1671] ss:$2 sm:$0xff] %v1667
    %v1673 = vld.sshfl [vmem:[#allocation1] sm:$0xff pattern:$0x75316420]
    %v1674 = vld.sshfl [vmem:[#allocation1 + $0x8] sm:$0xff pattern:$0x75316420]
    %v1675 = vld.sshfl [vmem:[#allocation1 + $0x10] sm:$0xff pattern:$0x75316420]
    %v1676 = vld.sshfl [vmem:[#allocation1 + $0x18] sm:$0xff pattern:$0x75316420]
    %1677 = vrot.lane.b32.xlu0 %v1673, 22
    %v1678 = vpop.permute.xlu0 %1677
    %1679 = vrot.lane.b32.xlu0 %v1674, 22
    %v1680 = vpop.permute.xlu0 %1679
    %1681 = vrot.lane.b32.xlu0 %v1675, 22
    %v1682 = vpop.permute.xlu0 %1681
    %1683 = vrot.lane.b32.xlu0 %v1676, 22
    %v1684 = vpop.permute.xlu0 %1683
    %vm1685 = vcmask 179200
    %v1686 = vsel %vm1685, %v1678, %v1680
    %v1687 = vsel %vm1685, %v1680, %v1682
    %v1688 = vsel %vm1685, %v1682, %v1684
    %v1690 = vsel %vm52, %v1665, 0
    %v1692 = vsel %vm56, %v1686, 0
    %v1694 = vsel %vm56, %v1687, 0
    %v1696 = vsel %vm56, %v1688, 0
    %1698 = vmatpush.msra.mxu0 0.0
    %1699 = vmatpush.msra.mxu0 0.0
    %1700 = vmatpush.msra.mxu0 0.0
    %1701 = vmatpush.msra.mxu0 0.0
    %1702 = vmatpush.msra.mxu0 0.0
    %1703 = vmatpush.msra.mxu0 0.0
    %1704 = vmatpush.msra.mxu0 0.0
    %1705 = vmatpush.msra.mxu0 0.0
    %1706 = vmatpush.msra.mxu0 0.0
    %1707 = vmatpush.msra.mxu0 0.0
    %1708 = vmatpush.msra.mxu0 0.0
    %1709 = vmatpush.msra.mxu0 0.0
    %1710 = vmatpush.msra.mxu0 0.0
    %1711 = vmatpush.msra.mxu0 0.0
    %1712 = vmatpush.msra.mxu0 0.0
    %1713 = vmatpush.msra.mxu0 %v1692
    %1714 = vmatmul.f32.gmra.mxu0 %v1690
    %v1715 = vpop.f32.mrf.mxu0
    %v1716 = vadd.f32 0.0, %v1715
    %1717 = vdwg.mxu0
    %1718 = vmatpush.msra.mxu0 0.0
    %1719 = vmatpush.msra.mxu0 0.0
    %1720 = vmatpush.msra.mxu0 0.0
    %1721 = vmatpush.msra.mxu0 0.0
    %1722 = vmatpush.msra.mxu0 0.0
    %1723 = vmatpush.msra.mxu0 0.0
    %1724 = vmatpush.msra.mxu0 0.0
    %1725 = vmatpush.msra.mxu0 0.0
    %1726 = vmatpush.msra.mxu0 0.0
    %1727 = vmatpush.msra.mxu0 0.0
    %1728 = vmatpush.msra.mxu0 0.0
    %1729 = vmatpush.msra.mxu0 0.0
    %1730 = vmatpush.msra.mxu0 0.0
    %1731 = vmatpush.msra.mxu0 0.0
    %1732 = vmatpush.msra.mxu0 0.0
    %1733 = vmatpush.msra.mxu0 %v1694
    %1734 = vmatmul.f32.gmra.mxu0 %v1690
    %v1735 = vpop.f32.mrf.mxu0
    %v1736 = vadd.f32 0.0, %v1735
    %1737 = vdwg.mxu0
    %1738 = vmatpush.msra.mxu0 0.0
    %1739 = vmatpush.msra.mxu0 0.0
    %1740 = vmatpush.msra.mxu0 0.0
    %1741 = vmatpush.msra.mxu0 0.0
    %1742 = vmatpush.msra.mxu0 0.0
    %1743 = vmatpush.msra.mxu0 0.0
    %1744 = vmatpush.msra.mxu0 0.0
    %1745 = vmatpush.msra.mxu0 0.0
    %1746 = vmatpush.msra.mxu0 0.0
    %1747 = vmatpush.msra.mxu0 0.0
    %1748 = vmatpush.msra.mxu0 0.0
    %1749 = vmatpush.msra.mxu0 0.0
    %1750 = vmatpush.msra.mxu0 0.0
    %1751 = vmatpush.msra.mxu0 0.0
    %1752 = vmatpush.msra.mxu0 0.0
    %1753 = vmatpush.msra.mxu0 %v1696
    %1754 = vmatmul.f32.gmra.mxu0 %v1690
    %v1755 = vpop.f32.mrf.mxu0
    %v1756 = vadd.f32 0.0, %v1755
    %1757 = vdwg.mxu0
    %v1758 = vadd.f32 %v1662, %v1716
    %v1759 = vadd.f32 %v1663, %v1736
    %v1760 = vadd.f32 %v1664, %v1756
    %v1761 = vadd.f32 %v1758, %v852
    %v1762 = vadd.f32 %v1759, %v852
    %v1763 = vadd.f32 %v1760, %v852
    %v1764 = vmax.f32 %v1761, 0.0
    %v1765 = vmax.f32 %v1762, 0.0
    %v1766 = vmax.f32 %v1763, 0.0
    %v1770 = vrot.slane %v1765, 7
    %v1771 = vrot.slane %v1766, 6
    %v1772 = vsel %vm865, %v1764, %v1770
    %v1773 = vsel %vm867, %v1772, %v1771
    %s1775 = scalar_lea.vmem %s6, 1
    %1776 = vst.msk [vmem:[%s1775] ss:$2 sm:$0x7] %vm873, %v1773
    %1777 = vst [vmem:[#allocation1] sm:$0xff] %v1764
    %1778 = vst [vmem:[#allocation1 + $0x9] sm:$0xff] %v1765
    %1779 = vst [vmem:[#allocation1 + $0x12] sm:$0xff] %v1766
    %s1780 = scalar_lea.vmem [#allocation1], 1
    %v1781 = vld [vmem:[%s1780] ss:$9 sm:$0xff]
    %s1783 = scalar_lea.vmem %s6, 7
    %1784 = vst.msk [vmem:[%s1783] ss:$2 sm:$0x7] %vm873, %v1781
    %1785 = vst [vmem:[#allocation1] sm:$0xff] %v1764
    %1786 = vst [vmem:[#allocation1 + $0x9] sm:$0xff] %v1765
    %1787 = vst [vmem:[#allocation1 + $0x12] sm:$0xff] %v1766
    %s1788 = scalar_lea.vmem [#allocation1], 2
    %v1789 = vld [vmem:[%s1788] ss:$9 sm:$0xff]
    %s1791 = scalar_lea.vmem %s6, 13
    %1792 = vst.msk [vmem:[%s1791] ss:$2 sm:$0x7] %vm873, %v1789
    %1793 = vst [vmem:[#allocation1] sm:$0xff] %v1764
    %1794 = vst [vmem:[#allocation1 + $0x9] sm:$0xff] %v1765
    %1795 = vst [vmem:[#allocation1 + $0x12] sm:$0xff] %v1766
    %s1796 = scalar_lea.vmem [#allocation1], 3
    %v1797 = vld [vmem:[%s1796] ss:$9 sm:$0xff]
    %s1799 = scalar_lea.vmem %s6, 19
    %1800 = vst.msk [vmem:[%s1799] ss:$2 sm:$0x7] %vm873, %v1797
    %1801 = vst [vmem:[#allocation1] sm:$0xff] %v1764
    %1802 = vst [vmem:[#allocation1 + $0x9] sm:$0xff] %v1765
    %1803 = vst [vmem:[#allocation1 + $0x12] sm:$0xff] %v1766
    %s1804 = scalar_lea.vmem [#allocation1], 4
    %v1805 = vld [vmem:[%s1804] ss:$9 sm:$0xff]
    %s1807 = scalar_lea.vmem %s6, 25
    %1808 = vst.msk [vmem:[%s1807] ss:$2 sm:$0x7] %vm873, %v1805
    %1809 = vst [vmem:[#allocation1] sm:$0xff] %v1764
    %1810 = vst [vmem:[#allocation1 + $0x9] sm:$0xff] %v1765
    %1811 = vst [vmem:[#allocation1 + $0x12] sm:$0xff] %v1766
    %s1812 = scalar_lea.vmem [#allocation1], 5
    %v1813 = vld [vmem:[%s1812] ss:$9 sm:$0xff]
    %s1815 = scalar_lea.vmem %s6, 31
    %1816 = vst.msk [vmem:[%s1815] ss:$2 sm:$0x7] %vm873, %v1813
    %1817 = vst [vmem:[#allocation1] sm:$0xff] %v1764
    %1818 = vst [vmem:[#allocation1 + $0x9] sm:$0xff] %v1765
    %1819 = vst [vmem:[#allocation1 + $0x12] sm:$0xff] %v1766
    %s1820 = scalar_lea.vmem [#allocation1], 6
    %v1821 = vld [vmem:[%s1820] ss:$9 sm:$0xff]
    %s1823 = scalar_lea.vmem %s6, 37
    %1824 = vst.msk [vmem:[%s1823] ss:$2 sm:$0x7] %vm873, %v1821
    %1825 = vst [vmem:[#allocation1] sm:$0xff] %v1764
    %1826 = vst [vmem:[#allocation1 + $0x9] sm:$0xff] %v1765
    %1827 = vst [vmem:[#allocation1 + $0x12] sm:$0xff] %v1766
    %s1828 = scalar_lea.vmem [#allocation1], 7
    %v1829 = vld [vmem:[%s1828] ss:$9 sm:$0xff]
    %s1831 = scalar_lea.vmem %s6, 43
    %1832 = vst.msk [vmem:[%s1831] ss:$2 sm:$0x7] %vm873, %v1829
    %v1833 = vld [vmem:[%s6] sm:$0xff]
    %v1834 = vld [vmem:[%s6 + $0x8] sm:$0xff]
    %v1835 = vld [vmem:[%s6 + $0x10] sm:$0xff]
    %v1836 = vld [vmem:[%s6 + $0x18] sm:$0xff]
    %v1837 = vld [vmem:[%s6 + $0x20] sm:$0xff]
    %v1838 = vld [vmem:[%s6 + $0x28] sm:$0xff]
    %v1839 = vld [vmem:[%s3] sm:$0xff]
    %v1840 = vld [vmem:[%s3 + $0x8] sm:$0xff]
    %v1841 = vld [vmem:[%s3 + $0x10] sm:$0xff]
    %v1842 = vld [vmem:[%s3 + $0x18] sm:$0xff]
    %v1843 = vld [vmem:[%s3 + $0x20] sm:$0xff]
    %v1844 = vld [vmem:[%s3 + $0x28] sm:$0xff]
    %v1845 = vld [vmem:[%s3 + $0x30] sm:$0xff]
    %v1846 = vld [vmem:[%s3 + $0x38] sm:$0xff]
    %v1847 = vld [vmem:[%s3 + $0x40] sm:$0xff]
    %v1848 = vld [vmem:[%s3 + $0x48] sm:$0xff]
    %v1849 = vld [vmem:[%s3 + $0x50] sm:$0xff]
    %v1850 = vld [vmem:[%s3 + $0x58] sm:$0xff]
    %v1851 = vld [vmem:[%s3 + $0x60] sm:$0xff]
    %v1852 = vld [vmem:[%s3 + $0x68] sm:$0xff]
    %v1853 = vld [vmem:[%s3 + $0x70] sm:$0xff]
    %v1854 = vld [vmem:[%s3 + $0x78] sm:$0xff]
    %v1855 = vld [vmem:[%s3 + $0x80] sm:$0xff]
    %v1856 = vld [vmem:[%s3 + $0x88] sm:$0xff]
    %v1857 = vld [vmem:[%s3 + $0x90] sm:$0xff]
    %v1858 = vld [vmem:[%s3 + $0x98] sm:$0xff]
    %v1859 = vld [vmem:[%s3 + $0xa0] sm:$0xff]
    %v1860 = vld [vmem:[%s3 + $0xa8] sm:$0xff]
    %v1861 = vld [vmem:[%s3 + $0xb0] sm:$0xff]
    %v1862 = vld [vmem:[%s3 + $0xb8] sm:$0xff]
    %v1863 = vld [vmem:[%s3 + $0xc0] sm:$0x3]
    %v1864 = vld [vmem:[%s3 + $0xc8] sm:$0x3]
    %v1865 = vld [vmem:[%s3 + $0xd0] sm:$0x3]
    %v1866 = vld [vmem:[%s3 + $0xd8] sm:$0x3]
    %v1867 = vld [vmem:[%s3 + $0xe0] sm:$0x3]
    %v1868 = vld [vmem:[%s3 + $0xe8] sm:$0x3]
    %v1869 = vld [vmem:[%s3 + $0xf0] sm:$0x3]
    %v1870 = vld [vmem:[%s3 + $0xf8] sm:$0x3]
    %v1871 = vld [vmem:[%s3 + $0x100] sm:$0x3]
    %v1872 = vld [vmem:[%s3 + $0x108] sm:$0x3]
    %v1873 = vld [vmem:[%s3 + $0x110] sm:$0x3]
    %v1874 = vld [vmem:[%s3 + $0x118] sm:$0x3]
    %v1875 = vld [vmem:[%s3 + $0x120] sm:$0x3]
    %v1876 = vld [vmem:[%s3 + $0x128] sm:$0x3]
    %v1877 = vld [vmem:[%s3 + $0x130] sm:$0x3]
    %v1878 = vld [vmem:[%s3 + $0x138] sm:$0x3]
    %v1879 = vld [vmem:[%s3 + $0x140] sm:$0x3]
    %v1880 = vld [vmem:[%s3 + $0x148] sm:$0x3]
    %v1881 = vld [vmem:[%s3 + $0x150] sm:$0x3]
    %v1882 = vld [vmem:[%s3 + $0x158] sm:$0x3]
    %v1883 = vld [vmem:[%s3 + $0x160] sm:$0x3]
    %v1884 = vld [vmem:[%s3 + $0x168] sm:$0x3]
    %v1885 = vld [vmem:[%s3 + $0x170] sm:$0x3]
    %v1886 = vld [vmem:[%s3 + $0x178] sm:$0x3]
    %v1887 = vld [vmem:[%s4] sm:$0x1]
    %v1889 = vperm.slane %v1887, 0
    %1897 = vst [vmem:[#allocation1] ss:$4 sm:$0xff] %v1833
    %s1898 = scalar_lea.vmem [#allocation1], 32
    %1899 = vst [vmem:[%s1898] ss:$4 sm:$0xff] %v1834
    %v1900 = vld.sshfl [vmem:[#allocation1] sm:$0xff pattern:$0x73625140]
    %v1901 = vld.sshfl [vmem:[#allocation1 + $0x8] sm:$0xff pattern:$0x73625140]
    %v1902 = vld.sshfl [vmem:[#allocation1 + $0x10] sm:$0xff pattern:$0x73625140]
    %v1903 = vld.sshfl [vmem:[#allocation1 + $0x18] sm:$0xff pattern:$0x73625140]
    %v1904 = vld.sshfl [vmem:[#allocation1 + $0x20] sm:$0xff pattern:$0x73625140]
    %v1905 = vld.sshfl [vmem:[#allocation1 + $0x28] sm:$0xff pattern:$0x73625140]
    %v1906 = vld.sshfl [vmem:[#allocation1 + $0x30] sm:$0xff pattern:$0x73625140]
    %v1907 = vld.sshfl [vmem:[#allocation1 + $0x38] sm:$0xff pattern:$0x73625140]
    %1908 = vst [vmem:[#allocation1] ss:$4 sm:$0xff] %v1835
    %1909 = vst [vmem:[%s1898] ss:$4 sm:$0xff] %v1836
    %v1910 = vld.sshfl [vmem:[#allocation1] sm:$0xff pattern:$0x73625140]
    %v1911 = vld.sshfl [vmem:[#allocation1 + $0x8] sm:$0xff pattern:$0x73625140]
    %v1912 = vld.sshfl [vmem:[#allocation1 + $0x10] sm:$0xff pattern:$0x73625140]
    %v1913 = vld.sshfl [vmem:[#allocation1 + $0x18] sm:$0xff pattern:$0x73625140]
    %v1914 = vld.sshfl [vmem:[#allocation1 + $0x20] sm:$0xff pattern:$0x73625140]
    %v1915 = vld.sshfl [vmem:[#allocation1 + $0x28] sm:$0xff pattern:$0x73625140]
    %v1916 = vld.sshfl [vmem:[#allocation1 + $0x30] sm:$0xff pattern:$0x73625140]
    %v1917 = vld.sshfl [vmem:[#allocation1 + $0x38] sm:$0xff pattern:$0x73625140]
    %1918 = vst [vmem:[#allocation1] ss:$4 sm:$0xff] %v1837
    %1919 = vst [vmem:[%s1898] ss:$4 sm:$0xff] %v1838
    %v1920 = vld.sshfl [vmem:[#allocation1] sm:$0xff pattern:$0x73625140]
    %v1921 = vld.sshfl [vmem:[#allocation1 + $0x8] sm:$0xff pattern:$0x73625140]
    %v1922 = vld.sshfl [vmem:[#allocation1 + $0x10] sm:$0xff pattern:$0x73625140]
    %v1923 = vld.sshfl [vmem:[#allocation1 + $0x18] sm:$0xff pattern:$0x73625140]
    %v1924 = vld.sshfl [vmem:[#allocation1 + $0x20] sm:$0xff pattern:$0x73625140]
    %v1925 = vld.sshfl [vmem:[#allocation1 + $0x28] sm:$0xff pattern:$0x73625140]
    %v1926 = vld.sshfl [vmem:[#allocation1 + $0x30] sm:$0xff pattern:$0x73625140]
    %v1927 = vld.sshfl [vmem:[#allocation1 + $0x38] sm:$0xff pattern:$0x73625140]
    %1952 = vmatpush.xpose.msra.mxu0 0.0
    %1953 = vmatpush.xpose.msra.mxu0 0.0
    %1954 = vmatpush.xpose.msra.mxu0 0.0
    %1955 = vmatpush.xpose.msra.mxu0 0.0
    %1956 = vmatpush.xpose.msra.mxu0 0.0
    %1957 = vmatpush.xpose.msra.mxu0 0.0
    %1958 = vmatpush.xpose.msra.mxu0 0.0
    %1959 = vmatpush.xpose.msra.mxu0 0.0
    %1960 = vmatpush.xpose.msra.mxu0 0.0
    %1961 = vmatpush.xpose.msra.mxu0 0.0
    %1962 = vmatpush.xpose.msra.mxu0 0.0
    %1963 = vmatpush.xpose.msra.mxu0 0.0
    %1964 = vmatpush.xpose.msra.mxu0 0.0
    %1965 = vmatpush.xpose.msra.mxu0 0.0
    %1966 = vmatpush.xpose.msra.mxu0 %v1863
    %1967 = vmatpush.xpose.msra.mxu0 %v1839
    %1968 = vmatmul.f32.gmra.mxu0 %v1900
    %v1969 = vpop.f32.mrf.mxu0
    %v1970 = vadd.f32 %v1889, %v1969
    %1971 = vdwg.mxu0
    %1972 = vmatpush.xpose.msra.mxu0 0.0
    %1973 = vmatpush.xpose.msra.mxu0 0.0
    %1974 = vmatpush.xpose.msra.mxu0 0.0
    %1975 = vmatpush.xpose.msra.mxu0 0.0
    %1976 = vmatpush.xpose.msra.mxu0 0.0
    %1977 = vmatpush.xpose.msra.mxu0 0.0
    %1978 = vmatpush.xpose.msra.mxu0 0.0
    %1979 = vmatpush.xpose.msra.mxu0 0.0
    %1980 = vmatpush.xpose.msra.mxu0 0.0
    %1981 = vmatpush.xpose.msra.mxu0 0.0
    %1982 = vmatpush.xpose.msra.mxu0 0.0
    %1983 = vmatpush.xpose.msra.mxu0 0.0
    %1984 = vmatpush.xpose.msra.mxu0 0.0
    %1985 = vmatpush.xpose.msra.mxu0 0.0
    %1986 = vmatpush.xpose.msra.mxu0 %v1864
    %1987 = vmatpush.xpose.msra.mxu0 %v1840
    %1988 = vmatmul.f32.gmra.mxu0 %v1901
    %v1989 = vpop.f32.mrf.mxu0
    %v1990 = vadd.f32 %v1970, %v1989
    %1991 = vdwg.mxu0
    %1992 = vmatpush.xpose.msra.mxu0 0.0
    %1993 = vmatpush.xpose.msra.mxu0 0.0
    %1994 = vmatpush.xpose.msra.mxu0 0.0
    %1995 = vmatpush.xpose.msra.mxu0 0.0
    %1996 = vmatpush.xpose.msra.mxu0 0.0
    %1997 = vmatpush.xpose.msra.mxu0 0.0
    %1998 = vmatpush.xpose.msra.mxu0 0.0
    %1999 = vmatpush.xpose.msra.mxu0 0.0
    %2000 = vmatpush.xpose.msra.mxu0 0.0
    %2001 = vmatpush.xpose.msra.mxu0 0.0
    %2002 = vmatpush.xpose.msra.mxu0 0.0
    %2003 = vmatpush.xpose.msra.mxu0 0.0
    %2004 = vmatpush.xpose.msra.mxu0 0.0
    %2005 = vmatpush.xpose.msra.mxu0 0.0
    %2006 = vmatpush.xpose.msra.mxu0 %v1865
    %2007 = vmatpush.xpose.msra.mxu0 %v1841
    %2008 = vmatmul.f32.gmra.mxu0 %v1902
    %v2009 = vpop.f32.mrf.mxu0
    %v2010 = vadd.f32 %v1990, %v2009
    %2011 = vdwg.mxu0
    %2012 = vmatpush.xpose.msra.mxu0 0.0
    %2013 = vmatpush.xpose.msra.mxu0 0.0
    %2014 = vmatpush.xpose.msra.mxu0 0.0
    %2015 = vmatpush.xpose.msra.mxu0 0.0
    %2016 = vmatpush.xpose.msra.mxu0 0.0
    %2017 = vmatpush.xpose.msra.mxu0 0.0
    %2018 = vmatpush.xpose.msra.mxu0 0.0
    %2019 = vmatpush.xpose.msra.mxu0 0.0
    %2020 = vmatpush.xpose.msra.mxu0 0.0
    %2021 = vmatpush.xpose.msra.mxu0 0.0
    %2022 = vmatpush.xpose.msra.mxu0 0.0
    %2023 = vmatpush.xpose.msra.mxu0 0.0
    %2024 = vmatpush.xpose.msra.mxu0 0.0
    %2025 = vmatpush.xpose.msra.mxu0 0.0
    %2026 = vmatpush.xpose.msra.mxu0 %v1866
    %2027 = vmatpush.xpose.msra.mxu0 %v1842
    %2028 = vmatmul.f32.gmra.mxu0 %v1903
    %v2029 = vpop.f32.mrf.mxu0
    %v2030 = vadd.f32 %v2010, %v2029
    %2031 = vdwg.mxu0
    %2032 = vmatpush.xpose.msra.mxu0 0.0
    %2033 = vmatpush.xpose.msra.mxu0 0.0
    %2034 = vmatpush.xpose.msra.mxu0 0.0
    %2035 = vmatpush.xpose.msra.mxu0 0.0
    %2036 = vmatpush.xpose.msra.mxu0 0.0
    %2037 = vmatpush.xpose.msra.mxu0 0.0
    %2038 = vmatpush.xpose.msra.mxu0 0.0
    %2039 = vmatpush.xpose.msra.mxu0 0.0
    %2040 = vmatpush.xpose.msra.mxu0 0.0
    %2041 = vmatpush.xpose.msra.mxu0 0.0
    %2042 = vmatpush.xpose.msra.mxu0 0.0
    %2043 = vmatpush.xpose.msra.mxu0 0.0
    %2044 = vmatpush.xpose.msra.mxu0 0.0
    %2045 = vmatpush.xpose.msra.mxu0 0.0
    %2046 = vmatpush.xpose.msra.mxu0 %v1867
    %2047 = vmatpush.xpose.msra.mxu0 %v1843
    %2048 = vmatmul.f32.gmra.mxu0 %v1904
    %v2049 = vpop.f32.mrf.mxu0
    %v2050 = vadd.f32 %v2030, %v2049
    %2051 = vdwg.mxu0
    %2052 = vmatpush.xpose.msra.mxu0 0.0
    %2053 = vmatpush.xpose.msra.mxu0 0.0
    %2054 = vmatpush.xpose.msra.mxu0 0.0
    %2055 = vmatpush.xpose.msra.mxu0 0.0
    %2056 = vmatpush.xpose.msra.mxu0 0.0
    %2057 = vmatpush.xpose.msra.mxu0 0.0
    %2058 = vmatpush.xpose.msra.mxu0 0.0
    %2059 = vmatpush.xpose.msra.mxu0 0.0
    %2060 = vmatpush.xpose.msra.mxu0 0.0
    %2061 = vmatpush.xpose.msra.mxu0 0.0
    %2062 = vmatpush.xpose.msra.mxu0 0.0
    %2063 = vmatpush.xpose.msra.mxu0 0.0
    %2064 = vmatpush.xpose.msra.mxu0 0.0
    %2065 = vmatpush.xpose.msra.mxu0 0.0
    %2066 = vmatpush.xpose.msra.mxu0 %v1868
    %2067 = vmatpush.xpose.msra.mxu0 %v1844
    %2068 = vmatmul.f32.gmra.mxu0 %v1905
    %v2069 = vpop.f32.mrf.mxu0
    %v2070 = vadd.f32 %v2050, %v2069
    %2071 = vdwg.mxu0
    %2072 = vmatpush.xpose.msra.mxu0 0.0
    %2073 = vmatpush.xpose.msra.mxu0 0.0
    %2074 = vmatpush.xpose.msra.mxu0 0.0
    %2075 = vmatpush.xpose.msra.mxu0 0.0
    %2076 = vmatpush.xpose.msra.mxu0 0.0
    %2077 = vmatpush.xpose.msra.mxu0 0.0
    %2078 = vmatpush.xpose.msra.mxu0 0.0
    %2079 = vmatpush.xpose.msra.mxu0 0.0
    %2080 = vmatpush.xpose.msra.mxu0 0.0
    %2081 = vmatpush.xpose.msra.mxu0 0.0
    %2082 = vmatpush.xpose.msra.mxu0 0.0
    %2083 = vmatpush.xpose.msra.mxu0 0.0
    %2084 = vmatpush.xpose.msra.mxu0 0.0
    %2085 = vmatpush.xpose.msra.mxu0 0.0
    %2086 = vmatpush.xpose.msra.mxu0 %v1869
    %2087 = vmatpush.xpose.msra.mxu0 %v1845
    %2088 = vmatmul.f32.gmra.mxu0 %v1906
    %v2089 = vpop.f32.mrf.mxu0
    %v2090 = vadd.f32 %v2070, %v2089
    %2091 = vdwg.mxu0
    %2092 = vmatpush.xpose.msra.mxu0 0.0
    %2093 = vmatpush.xpose.msra.mxu0 0.0
    %2094 = vmatpush.xpose.msra.mxu0 0.0
    %2095 = vmatpush.xpose.msra.mxu0 0.0
    %2096 = vmatpush.xpose.msra.mxu0 0.0
    %2097 = vmatpush.xpose.msra.mxu0 0.0
    %2098 = vmatpush.xpose.msra.mxu0 0.0
    %2099 = vmatpush.xpose.msra.mxu0 0.0
    %2100 = vmatpush.xpose.msra.mxu0 0.0
    %2101 = vmatpush.xpose.msra.mxu0 0.0
    %2102 = vmatpush.xpose.msra.mxu0 0.0
    %2103 = vmatpush.xpose.msra.mxu0 0.0
    %2104 = vmatpush.xpose.msra.mxu0 0.0
    %2105 = vmatpush.xpose.msra.mxu0 0.0
    %2106 = vmatpush.xpose.msra.mxu0 %v1870
    %2107 = vmatpush.xpose.msra.mxu0 %v1846
    %2108 = vmatmul.f32.gmra.mxu0 %v1907
    %v2109 = vpop.f32.mrf.mxu0
    %v2110 = vadd.f32 %v2090, %v2109
    %2111 = vdwg.mxu0
    %2112 = vmatpush.xpose.msra.mxu0 0.0
    %2113 = vmatpush.xpose.msra.mxu0 0.0
    %2114 = vmatpush.xpose.msra.mxu0 0.0
    %2115 = vmatpush.xpose.msra.mxu0 0.0
    %2116 = vmatpush.xpose.msra.mxu0 0.0
    %2117 = vmatpush.xpose.msra.mxu0 0.0
    %2118 = vmatpush.xpose.msra.mxu0 0.0
    %2119 = vmatpush.xpose.msra.mxu0 0.0
    %2120 = vmatpush.xpose.msra.mxu0 0.0
    %2121 = vmatpush.xpose.msra.mxu0 0.0
    %2122 = vmatpush.xpose.msra.mxu0 0.0
    %2123 = vmatpush.xpose.msra.mxu0 0.0
    %2124 = vmatpush.xpose.msra.mxu0 0.0
    %2125 = vmatpush.xpose.msra.mxu0 0.0
    %2126 = vmatpush.xpose.msra.mxu0 %v1871
    %2127 = vmatpush.xpose.msra.mxu0 %v1847
    %2128 = vmatmul.f32.gmra.mxu0 %v1910
    %v2129 = vpop.f32.mrf.mxu0
    %v2130 = vadd.f32 %v2110, %v2129
    %2131 = vdwg.mxu0
    %2132 = vmatpush.xpose.msra.mxu0 0.0
    %2133 = vmatpush.xpose.msra.mxu0 0.0
    %2134 = vmatpush.xpose.msra.mxu0 0.0
    %2135 = vmatpush.xpose.msra.mxu0 0.0
    %2136 = vmatpush.xpose.msra.mxu0 0.0
    %2137 = vmatpush.xpose.msra.mxu0 0.0
    %2138 = vmatpush.xpose.msra.mxu0 0.0
    %2139 = vmatpush.xpose.msra.mxu0 0.0
    %2140 = vmatpush.xpose.msra.mxu0 0.0
    %2141 = vmatpush.xpose.msra.mxu0 0.0
    %2142 = vmatpush.xpose.msra.mxu0 0.0
    %2143 = vmatpush.xpose.msra.mxu0 0.0
    %2144 = vmatpush.xpose.msra.mxu0 0.0
    %2145 = vmatpush.xpose.msra.mxu0 0.0
    %2146 = vmatpush.xpose.msra.mxu0 %v1872
    %2147 = vmatpush.xpose.msra.mxu0 %v1848
    %2148 = vmatmul.f32.gmra.mxu0 %v1911
    %v2149 = vpop.f32.mrf.mxu0
    %v2150 = vadd.f32 %v2130, %v2149
    %2151 = vdwg.mxu0
    %2152 = vmatpush.xpose.msra.mxu0 0.0
    %2153 = vmatpush.xpose.msra.mxu0 0.0
    %2154 = vmatpush.xpose.msra.mxu0 0.0
    %2155 = vmatpush.xpose.msra.mxu0 0.0
    %2156 = vmatpush.xpose.msra.mxu0 0.0
    %2157 = vmatpush.xpose.msra.mxu0 0.0
    %2158 = vmatpush.xpose.msra.mxu0 0.0
    %2159 = vmatpush.xpose.msra.mxu0 0.0
    %2160 = vmatpush.xpose.msra.mxu0 0.0
    %2161 = vmatpush.xpose.msra.mxu0 0.0
    %2162 = vmatpush.xpose.msra.mxu0 0.0
    %2163 = vmatpush.xpose.msra.mxu0 0.0
    %2164 = vmatpush.xpose.msra.mxu0 0.0
    %2165 = vmatpush.xpose.msra.mxu0 0.0
    %2166 = vmatpush.xpose.msra.mxu0 %v1873
    %2167 = vmatpush.xpose.msra.mxu0 %v1849
    %2168 = vmatmul.f32.gmra.mxu0 %v1912
    %v2169 = vpop.f32.mrf.mxu0
    %v2170 = vadd.f32 %v2150, %v2169
    %2171 = vdwg.mxu0
    %2172 = vmatpush.xpose.msra.mxu0 0.0
    %2173 = vmatpush.xpose.msra.mxu0 0.0
    %2174 = vmatpush.xpose.msra.mxu0 0.0
    %2175 = vmatpush.xpose.msra.mxu0 0.0
    %2176 = vmatpush.xpose.msra.mxu0 0.0
    %2177 = vmatpush.xpose.msra.mxu0 0.0
    %2178 = vmatpush.xpose.msra.mxu0 0.0
    %2179 = vmatpush.xpose.msra.mxu0 0.0
    %2180 = vmatpush.xpose.msra.mxu0 0.0
    %2181 = vmatpush.xpose.msra.mxu0 0.0
    %2182 = vmatpush.xpose.msra.mxu0 0.0
    %2183 = vmatpush.xpose.msra.mxu0 0.0
    %2184 = vmatpush.xpose.msra.mxu0 0.0
    %2185 = vmatpush.xpose.msra.mxu0 0.0
    %2186 = vmatpush.xpose.msra.mxu0 %v1874
    %2187 = vmatpush.xpose.msra.mxu0 %v1850
    %2188 = vmatmul.f32.gmra.mxu0 %v1913
    %v2189 = vpop.f32.mrf.mxu0
    %v2190 = vadd.f32 %v2170, %v2189
    %2191 = vdwg.mxu0
    %2192 = vmatpush.xpose.msra.mxu0 0.0
    %2193 = vmatpush.xpose.msra.mxu0 0.0
    %2194 = vmatpush.xpose.msra.mxu0 0.0
    %2195 = vmatpush.xpose.msra.mxu0 0.0
    %2196 = vmatpush.xpose.msra.mxu0 0.0
    %2197 = vmatpush.xpose.msra.mxu0 0.0
    %2198 = vmatpush.xpose.msra.mxu0 0.0
    %2199 = vmatpush.xpose.msra.mxu0 0.0
    %2200 = vmatpush.xpose.msra.mxu0 0.0
    %2201 = vmatpush.xpose.msra.mxu0 0.0
    %2202 = vmatpush.xpose.msra.mxu0 0.0
    %2203 = vmatpush.xpose.msra.mxu0 0.0
    %2204 = vmatpush.xpose.msra.mxu0 0.0
    %2205 = vmatpush.xpose.msra.mxu0 0.0
    %2206 = vmatpush.xpose.msra.mxu0 %v1875
    %2207 = vmatpush.xpose.msra.mxu0 %v1851
    %2208 = vmatmul.f32.gmra.mxu0 %v1914
    %v2209 = vpop.f32.mrf.mxu0
    %v2210 = vadd.f32 %v2190, %v2209
    %2211 = vdwg.mxu0
    %2212 = vmatpush.xpose.msra.mxu0 0.0
    %2213 = vmatpush.xpose.msra.mxu0 0.0
    %2214 = vmatpush.xpose.msra.mxu0 0.0
    %2215 = vmatpush.xpose.msra.mxu0 0.0
    %2216 = vmatpush.xpose.msra.mxu0 0.0
    %2217 = vmatpush.xpose.msra.mxu0 0.0
    %2218 = vmatpush.xpose.msra.mxu0 0.0
    %2219 = vmatpush.xpose.msra.mxu0 0.0
    %2220 = vmatpush.xpose.msra.mxu0 0.0
    %2221 = vmatpush.xpose.msra.mxu0 0.0
    %2222 = vmatpush.xpose.msra.mxu0 0.0
    %2223 = vmatpush.xpose.msra.mxu0 0.0
    %2224 = vmatpush.xpose.msra.mxu0 0.0
    %2225 = vmatpush.xpose.msra.mxu0 0.0
    %2226 = vmatpush.xpose.msra.mxu0 %v1876
    %2227 = vmatpush.xpose.msra.mxu0 %v1852
    %2228 = vmatmul.f32.gmra.mxu0 %v1915
    %v2229 = vpop.f32.mrf.mxu0
    %v2230 = vadd.f32 %v2210, %v2229
    %2231 = vdwg.mxu0
    %2232 = vmatpush.xpose.msra.mxu0 0.0
    %2233 = vmatpush.xpose.msra.mxu0 0.0
    %2234 = vmatpush.xpose.msra.mxu0 0.0
    %2235 = vmatpush.xpose.msra.mxu0 0.0
    %2236 = vmatpush.xpose.msra.mxu0 0.0
    %2237 = vmatpush.xpose.msra.mxu0 0.0
    %2238 = vmatpush.xpose.msra.mxu0 0.0
    %2239 = vmatpush.xpose.msra.mxu0 0.0
    %2240 = vmatpush.xpose.msra.mxu0 0.0
    %2241 = vmatpush.xpose.msra.mxu0 0.0
    %2242 = vmatpush.xpose.msra.mxu0 0.0
    %2243 = vmatpush.xpose.msra.mxu0 0.0
    %2244 = vmatpush.xpose.msra.mxu0 0.0
    %2245 = vmatpush.xpose.msra.mxu0 0.0
    %2246 = vmatpush.xpose.msra.mxu0 %v1877
    %2247 = vmatpush.xpose.msra.mxu0 %v1853
    %2248 = vmatmul.f32.gmra.mxu0 %v1916
    %v2249 = vpop.f32.mrf.mxu0
    %v2250 = vadd.f32 %v2230, %v2249
    %2251 = vdwg.mxu0
    %2252 = vmatpush.xpose.msra.mxu0 0.0
    %2253 = vmatpush.xpose.msra.mxu0 0.0
    %2254 = vmatpush.xpose.msra.mxu0 0.0
    %2255 = vmatpush.xpose.msra.mxu0 0.0
    %2256 = vmatpush.xpose.msra.mxu0 0.0
    %2257 = vmatpush.xpose.msra.mxu0 0.0
    %2258 = vmatpush.xpose.msra.mxu0 0.0
    %2259 = vmatpush.xpose.msra.mxu0 0.0
    %2260 = vmatpush.xpose.msra.mxu0 0.0
    %2261 = vmatpush.xpose.msra.mxu0 0.0
    %2262 = vmatpush.xpose.msra.mxu0 0.0
    %2263 = vmatpush.xpose.msra.mxu0 0.0
    %2264 = vmatpush.xpose.msra.mxu0 0.0
    %2265 = vmatpush.xpose.msra.mxu0 0.0
    %2266 = vmatpush.xpose.msra.mxu0 %v1878
    %2267 = vmatpush.xpose.msra.mxu0 %v1854
    %2268 = vmatmul.f32.gmra.mxu0 %v1917
    %v2269 = vpop.f32.mrf.mxu0
    %v2270 = vadd.f32 %v2250, %v2269
    %2271 = vdwg.mxu0
    %2272 = vmatpush.xpose.msra.mxu0 0.0
    %2273 = vmatpush.xpose.msra.mxu0 0.0
    %2274 = vmatpush.xpose.msra.mxu0 0.0
    %2275 = vmatpush.xpose.msra.mxu0 0.0
    %2276 = vmatpush.xpose.msra.mxu0 0.0
    %2277 = vmatpush.xpose.msra.mxu0 0.0
    %2278 = vmatpush.xpose.msra.mxu0 0.0
    %2279 = vmatpush.xpose.msra.mxu0 0.0
    %2280 = vmatpush.xpose.msra.mxu0 0.0
    %2281 = vmatpush.xpose.msra.mxu0 0.0
    %2282 = vmatpush.xpose.msra.mxu0 0.0
    %2283 = vmatpush.xpose.msra.mxu0 0.0
    %2284 = vmatpush.xpose.msra.mxu0 0.0
    %2285 = vmatpush.xpose.msra.mxu0 0.0
    %2286 = vmatpush.xpose.msra.mxu0 %v1879
    %2287 = vmatpush.xpose.msra.mxu0 %v1855
    %2288 = vmatmul.f32.gmra.mxu0 %v1920
    %v2289 = vpop.f32.mrf.mxu0
    %v2290 = vadd.f32 %v2270, %v2289
    %2291 = vdwg.mxu0
    %2292 = vmatpush.xpose.msra.mxu0 0.0
    %2293 = vmatpush.xpose.msra.mxu0 0.0
    %2294 = vmatpush.xpose.msra.mxu0 0.0
    %2295 = vmatpush.xpose.msra.mxu0 0.0
    %2296 = vmatpush.xpose.msra.mxu0 0.0
    %2297 = vmatpush.xpose.msra.mxu0 0.0
    %2298 = vmatpush.xpose.msra.mxu0 0.0
    %2299 = vmatpush.xpose.msra.mxu0 0.0
    %2300 = vmatpush.xpose.msra.mxu0 0.0
    %2301 = vmatpush.xpose.msra.mxu0 0.0
    %2302 = vmatpush.xpose.msra.mxu0 0.0
    %2303 = vmatpush.xpose.msra.mxu0 0.0
    %2304 = vmatpush.xpose.msra.mxu0 0.0
    %2305 = vmatpush.xpose.msra.mxu0 0.0
    %2306 = vmatpush.xpose.msra.mxu0 %v1880
    %2307 = vmatpush.xpose.msra.mxu0 %v1856
    %2308 = vmatmul.f32.gmra.mxu0 %v1921
    %v2309 = vpop.f32.mrf.mxu0
    %v2310 = vadd.f32 %v2290, %v2309
    %2311 = vdwg.mxu0
    %2312 = vmatpush.xpose.msra.mxu0 0.0
    %2313 = vmatpush.xpose.msra.mxu0 0.0
    %2314 = vmatpush.xpose.msra.mxu0 0.0
    %2315 = vmatpush.xpose.msra.mxu0 0.0
    %2316 = vmatpush.xpose.msra.mxu0 0.0
    %2317 = vmatpush.xpose.msra.mxu0 0.0
    %2318 = vmatpush.xpose.msra.mxu0 0.0
    %2319 = vmatpush.xpose.msra.mxu0 0.0
    %2320 = vmatpush.xpose.msra.mxu0 0.0
    %2321 = vmatpush.xpose.msra.mxu0 0.0
    %2322 = vmatpush.xpose.msra.mxu0 0.0
    %2323 = vmatpush.xpose.msra.mxu0 0.0
    %2324 = vmatpush.xpose.msra.mxu0 0.0
    %2325 = vmatpush.xpose.msra.mxu0 0.0
    %2326 = vmatpush.xpose.msra.mxu0 %v1881
    %2327 = vmatpush.xpose.msra.mxu0 %v1857
    %2328 = vmatmul.f32.gmra.mxu0 %v1922
    %v2329 = vpop.f32.mrf.mxu0
    %v2330 = vadd.f32 %v2310, %v2329
    %2331 = vdwg.mxu0
    %2332 = vmatpush.xpose.msra.mxu0 0.0
    %2333 = vmatpush.xpose.msra.mxu0 0.0
    %2334 = vmatpush.xpose.msra.mxu0 0.0
    %2335 = vmatpush.xpose.msra.mxu0 0.0
    %2336 = vmatpush.xpose.msra.mxu0 0.0
    %2337 = vmatpush.xpose.msra.mxu0 0.0
    %2338 = vmatpush.xpose.msra.mxu0 0.0
    %2339 = vmatpush.xpose.msra.mxu0 0.0
    %2340 = vmatpush.xpose.msra.mxu0 0.0
    %2341 = vmatpush.xpose.msra.mxu0 0.0
    %2342 = vmatpush.xpose.msra.mxu0 0.0
    %2343 = vmatpush.xpose.msra.mxu0 0.0
    %2344 = vmatpush.xpose.msra.mxu0 0.0
    %2345 = vmatpush.xpose.msra.mxu0 0.0
    %2346 = vmatpush.xpose.msra.mxu0 %v1882
    %2347 = vmatpush.xpose.msra.mxu0 %v1858
    %2348 = vmatmul.f32.gmra.mxu0 %v1923
    %v2349 = vpop.f32.mrf.mxu0
    %v2350 = vadd.f32 %v2330, %v2349
    %2351 = vdwg.mxu0
    %2352 = vmatpush.xpose.msra.mxu0 0.0
    %2353 = vmatpush.xpose.msra.mxu0 0.0
    %2354 = vmatpush.xpose.msra.mxu0 0.0
    %2355 = vmatpush.xpose.msra.mxu0 0.0
    %2356 = vmatpush.xpose.msra.mxu0 0.0
    %2357 = vmatpush.xpose.msra.mxu0 0.0
    %2358 = vmatpush.xpose.msra.mxu0 0.0
    %2359 = vmatpush.xpose.msra.mxu0 0.0
    %2360 = vmatpush.xpose.msra.mxu0 0.0
    %2361 = vmatpush.xpose.msra.mxu0 0.0
    %2362 = vmatpush.xpose.msra.mxu0 0.0
    %2363 = vmatpush.xpose.msra.mxu0 0.0
    %2364 = vmatpush.xpose.msra.mxu0 0.0
    %2365 = vmatpush.xpose.msra.mxu0 0.0
    %2366 = vmatpush.xpose.msra.mxu0 %v1883
    %2367 = vmatpush.xpose.msra.mxu0 %v1859
    %2368 = vmatmul.f32.gmra.mxu0 %v1924
    %v2369 = vpop.f32.mrf.mxu0
    %v2370 = vadd.f32 %v2350, %v2369
    %2371 = vdwg.mxu0
    %2372 = vmatpush.xpose.msra.mxu0 0.0
    %2373 = vmatpush.xpose.msra.mxu0 0.0
    %2374 = vmatpush.xpose.msra.mxu0 0.0
    %2375 = vmatpush.xpose.msra.mxu0 0.0
    %2376 = vmatpush.xpose.msra.mxu0 0.0
    %2377 = vmatpush.xpose.msra.mxu0 0.0
    %2378 = vmatpush.xpose.msra.mxu0 0.0
    %2379 = vmatpush.xpose.msra.mxu0 0.0
    %2380 = vmatpush.xpose.msra.mxu0 0.0
    %2381 = vmatpush.xpose.msra.mxu0 0.0
    %2382 = vmatpush.xpose.msra.mxu0 0.0
    %2383 = vmatpush.xpose.msra.mxu0 0.0
    %2384 = vmatpush.xpose.msra.mxu0 0.0
    %2385 = vmatpush.xpose.msra.mxu0 0.0
    %2386 = vmatpush.xpose.msra.mxu0 %v1884
    %2387 = vmatpush.xpose.msra.mxu0 %v1860
    %2388 = vmatmul.f32.gmra.mxu0 %v1925
    %v2389 = vpop.f32.mrf.mxu0
    %v2390 = vadd.f32 %v2370, %v2389
    %2391 = vdwg.mxu0
    %2392 = vmatpush.xpose.msra.mxu0 0.0
    %2393 = vmatpush.xpose.msra.mxu0 0.0
    %2394 = vmatpush.xpose.msra.mxu0 0.0
    %2395 = vmatpush.xpose.msra.mxu0 0.0
    %2396 = vmatpush.xpose.msra.mxu0 0.0
    %2397 = vmatpush.xpose.msra.mxu0 0.0
    %2398 = vmatpush.xpose.msra.mxu0 0.0
    %2399 = vmatpush.xpose.msra.mxu0 0.0
    %2400 = vmatpush.xpose.msra.mxu0 0.0
    %2401 = vmatpush.xpose.msra.mxu0 0.0
    %2402 = vmatpush.xpose.msra.mxu0 0.0
    %2403 = vmatpush.xpose.msra.mxu0 0.0
    %2404 = vmatpush.xpose.msra.mxu0 0.0
    %2405 = vmatpush.xpose.msra.mxu0 0.0
    %2406 = vmatpush.xpose.msra.mxu0 %v1885
    %2407 = vmatpush.xpose.msra.mxu0 %v1861
    %2408 = vmatmul.f32.gmra.mxu0 %v1926
    %v2409 = vpop.f32.mrf.mxu0
    %v2410 = vadd.f32 %v2390, %v2409
    %2411 = vdwg.mxu0
    %2412 = vmatpush.xpose.msra.mxu0 0.0
    %2413 = vmatpush.xpose.msra.mxu0 0.0
    %2414 = vmatpush.xpose.msra.mxu0 0.0
    %2415 = vmatpush.xpose.msra.mxu0 0.0
    %2416 = vmatpush.xpose.msra.mxu0 0.0
    %2417 = vmatpush.xpose.msra.mxu0 0.0
    %2418 = vmatpush.xpose.msra.mxu0 0.0
    %2419 = vmatpush.xpose.msra.mxu0 0.0
    %2420 = vmatpush.xpose.msra.mxu0 0.0
    %2421 = vmatpush.xpose.msra.mxu0 0.0
    %2422 = vmatpush.xpose.msra.mxu0 0.0
    %2423 = vmatpush.xpose.msra.mxu0 0.0
    %2424 = vmatpush.xpose.msra.mxu0 0.0
    %2425 = vmatpush.xpose.msra.mxu0 0.0
    %2426 = vmatpush.xpose.msra.mxu0 %v1886
    %2427 = vmatpush.xpose.msra.mxu0 %v1862
    %2428 = vmatmul.f32.gmra.mxu0 %v1927
    %v2429 = vpop.f32.mrf.mxu0
    %v2430 = vadd.f32 %v2410, %v2429
    %2431 = vdwg.mxu0
    %vm2432 = vcmask 74752
    %2433 = vst.msk [vmem:[#allocation2] sm:$0x3] %vm2432, %v2430
    // Predicated region
    $region22: #{_sequential_forward_impl.1} parent=1 // pred_check
      _
    $region23: #{_sequential_forward_impl.1} parent=1 // pred_check_branch
      %2435 = sbr.rel (0) target = $region25
    $region24: #{_sequential_forward_impl.1} parent=1 // pred_region
      %2437 = vsyncadd [#allocation3], 0
      %s2439 = sshll.u32 [#allocation2], 4
      %s2440 = int_to_ptr.vmem [resolvable:$true] %s2439
      %s2441 = sshll.u32 %s5, 4
      %s2442 = int_to_ptr.hbm [resolvable:$true] %s2441
      %2444 = dma.vmem_to_hbm [thread:$0]  %s2440, 32, %s2442, [#allocation3]
    $region25: #{_sequential_forward_impl.1} parent=1 // pred_fallthru
      _
    // Predicated region
    $region26: #{_sequential_forward_impl.1} parent=1 // pred_check
      _
    $region27: #{_sequential_forward_impl.1} parent=1 // pred_check_branch
      %2446 = sbr.rel (0) target = $region29
    $region28: #{_sequential_forward_impl.1} parent=1 // pred_region
      _
    $region29: #{_sequential_forward_impl.1} parent=1 // pred_fallthru
      _
    // Predicated region
    $region30: #{_sequential_forward_impl.1} parent=1 // pred_check
      _
    $region31: #{_sequential_forward_impl.1} parent=1 // pred_check_branch
      %2448 = sbr.rel (0) target = $region33
    $region32: #{_sequential_forward_impl.1} parent=1 // pred_region
      %2450 = dma.done [#allocation3], 32
    $region33: #{_sequential_forward_impl.1} parent=1 // pred_fallthru
      _
    // Predicated region
    $region34: #{_sequential_forward_impl.1} parent=1 // pred_check
      _
    $region35: #{_sequential_forward_impl.1} parent=1 // pred_check_branch
      %2452 = sbr.rel (0) target = $region37
    $region36: #{_sequential_forward_impl.1} parent=1 // pred_region
      _
    $region37: #{_sequential_forward_impl.1} parent=1 // pred_fallthru
      _
    %2453 = vsyncpa [#allocation3], 1

</llo_original>
